<compile_context>
chip_gen: v5e
topology: v5e:2x2
jax: 0.10.0
libtpu: 0.0.40
codegen_flags: <defaults>
</compile_context>

<pallas_src>
import functools

import jax
import jax.numpy as jnp
from jax.experimental import pallas as pl
from jax.experimental.pallas import tpu as pltpu

KH = KW = 3  # 3x3 conv


def _conv_bn_relu_kernel(x_ref, w_ref, b_ref, o_ref, *, cin, cout, h, w):
    # x_ref: (Cin*H, W)  VMEM -- one image (N squeezed out by the BlockSpec),
    #                            channel planes stacked along the sublane axis
    # w_ref: (Cout*Cin*KH*KW,) SMEM -- BN-scale-folded conv weights, OIHW order
    # b_ref: (Cout,)           SMEM -- folded BN/conv bias
    # o_ref: (Cout*H, W) VMEM
    #
    # Boundary masks depend only on (dh, dw); build them once (hoisted out of
    # the channel loop).
    row = jax.lax.broadcasted_iota(jnp.int32, (h, 1), 0)   # sublane index
    col = jax.lax.broadcasted_iota(jnp.int32, (1, w), 1)   # lane index
    h_masks = {-1: row >= 1, 0: None, 1: row <= h - 2}
    w_masks = {-1: col >= 1, 0: None, 1: col <= w - 2}

    accs = [jnp.zeros((h, w), jnp.float32) for _ in range(cout)]

    for ci in range(cin):
        # One (H, W) load per input channel; reused for all 9 taps x Cout.
        xc = x_ref[pl.ds(ci * h, h), :].astype(jnp.float32)
        for kh in range(KH):
            dh = kh - 1
            # Vertical tap once per (ci, dh): sublane roll + row mask.
            # xv[i, j] = xc[i + dh, j], zero where i + dh is out of bounds
            # (wrapped rows always land on the masked boundary rows).
            xv = xc if dh == 0 else pltpu.roll(xc, (-dh) % h, axis=0)
            if h_masks[dh] is not None:
                xv = jnp.where(h_masks[dh], xv, 0.0)
            for kw in range(KW):
                dw = kw - 1
                # Horizontal tap: lane roll + column mask.
                s = xv if dw == 0 else pltpu.roll(xv, (-dw) % w, axis=1)
                if w_masks[dw] is not None:
                    s = jnp.where(w_masks[dw], s, 0.0)
                # Reuse the shifted plane for every output channel.
                for co in range(cout):
                    flat = ((co * cin + ci) * KH + kh) * KW + kw  # static int
                    accs[co] = accs[co] + s * w_ref[flat]

    # Folded bias + ReLU; one (H, W) store per output channel.
    for co in range(cout):
        y = jnp.maximum(accs[co] + b_ref[co], 0.0)
        o_ref[pl.ds(co * h, h), :] = y.astype(o_ref.dtype)


def conv2d_bn_relu(x, conv_w, conv_b, gamma, beta, run_mean, run_var, eps=1e-5):
    """x: (N, Cin, H, W) NCHW; conv_w: (Cout, Cin, 3, 3) OIHW. Returns (N, Cout, H, W)."""
    n, cin, h, w = x.shape
    cout = conv_w.shape[0]

    # Fold eval-mode BN + conv bias exactly:
    #   scale*(conv(x)+b-mean)+beta == conv(x; scale*w) + (beta + scale*(b-mean))
    scale = (gamma / jnp.sqrt(run_var + eps)).astype(jnp.float32)
    bias = (beta + scale * (conv_b - run_mean)).astype(jnp.float32)
    w_folded = (conv_w.astype(jnp.float32) * scale[:, None, None, None]).reshape(-1)

    # Free reshape (no transpose, no HBM copy): NCHW -> (N, Cin*H, W).
    x_rows = x.reshape(n, cin * h, w)

    kernel = functools.partial(_conv_bn_relu_kernel, cin=cin, cout=cout, h=h, w=w)

    itemsize = jnp.dtype(x.dtype).itemsize
    out = pl.pallas_call(
        kernel,
        out_shape=jax.ShapeDtypeStruct((n, cout * h, w), x.dtype),
        grid=(n,),  # one image per step; "parallel" lets v7x shard across both TCs
        in_specs=[
            pl.BlockSpec((None, cin * h, w), lambda i: (i, 0, 0)),
            pl.BlockSpec(memory_space=pltpu.SMEM),
            pl.BlockSpec(memory_space=pltpu.SMEM),
        ],
        out_specs=pl.BlockSpec((None, cout * h, w), lambda i: (i, 0, 0)),
        compiler_params=pltpu.CompilerParams(
            dimension_semantics=("parallel",),
        ),
        cost_estimate=pl.CostEstimate(
            flops=2 * KH * KW * cin * cout * n * h * w,
            bytes_accessed=(n * cin * h * w * itemsize
                            + n * cout * h * w * itemsize
                            + (w_folded.size + bias.size) * 4),
            transcendentals=0,
        ),
    )(x_rows, w_folded, bias)
    # TODO(synk): at real segmentation resolutions, additionally grid over
    # H-strips with a 2-row halo (and pad W to a multiple of 128), set
    # pltpu.CompilerParams(vmem_limit_bytes=...) so double-buffered blocks fit
    # v7x's 64 MiB (32 MiB scoped) / v5e's 16 MiB scoped VMEM, and consider
    # pipeline_mode=pl.Buffered(3) on the input spec if the DMA is exposed.

    # Free reshape back to NCHW.
    return out.reshape(n, cout, h, w)


def light_fcn_forward(img, params):
    x = conv2d_bn_relu(img, *params)
    # TODO(synk): y = deeplabv3_mobilenet_v3_large(x) not implemented (see header).
    return x


if __name__ == "__main__":
    key = jax.random.PRNGKey(0)
    k1, k2, k3, k4, k5, k6, k7 = jax.random.split(key, 7)

    N, C, H, W = 2, 3, 16, 16
    img = jax.random.normal(k1, (N, C, H, W), jnp.float32)

    # Deterministic synthetic parameters (shapes from conv2d_bn_relu(3, 3, 3)).
    w = 0.1 * jax.random.normal(k2, (3, 3, KH, KW), jnp.float32)       # Conv2d weight (OIHW)
    conv_b = 0.1 * jax.random.normal(k3, (3,), jnp.float32)            # Conv2d bias
    gamma = 1.0 + 0.1 * jax.random.normal(k4, (3,), jnp.float32)       # BN weight
    beta = 0.1 * jax.random.normal(k5, (3,), jnp.float32)              # BN bias
    run_mean = 0.1 * jax.random.normal(k6, (3,), jnp.float32)          # BN running mean
    run_var = 0.5 + jnp.abs(jax.random.normal(k7, (3,), jnp.float32))  # BN running var

    params = (w, conv_b, gamma, beta, run_mean, run_var)
    out = jax.block_until_ready(light_fcn_forward(img, params))

    # Pure-JAX reference for the kernelized stage.
    ref_conv = jax.lax.conv_general_dilated(
        img, w, window_strides=(1, 1), padding="SAME",
        dimension_numbers=("NCHW", "OIHW", "NCHW"),
    ) + conv_b[None, :, None, None]
    sc = gamma / jnp.sqrt(run_var + 1e-5)
    ref = jnp.maximum(
        sc[None, :, None, None] * (ref_conv - run_mean[None, :, None, None])
        + beta[None, :, None, None],
        0.0,
    )
    assert out.shape == (N, 3, H, W)
    assert jnp.allclose(out, ref, atol=1e-4, rtol=1e-4), "mismatch vs JAX reference"

    print("KERNEL_OK")
</pallas_src>

<mosaic_0001>
module attributes {stable_mosaic.version = 11 : i64} {
  func.func @_conv_bn_relu_kernel(%arg0: i32, %arg1: memref<1x48x16xf32, #tpu.memory_space<vmem>>, %arg2: memref<81xf32, #tpu.memory_space<smem>>, %arg3: memref<3xf32, #tpu.memory_space<smem>>, %arg4: memref<1x48x16xf32, #tpu.memory_space<vmem>>) attributes {dimension_semantics = [#tpu.dimension_semantics<parallel>], iteration_bounds = array<i64: 2>, scalar_prefetch = 0 : i64, scratch_operands = 0 : i64, tpu.core_type = #tpu.core_type<tc>, window_params = [{transform_indices = @transform_0, window_bounds = array<i64: 1, 48, 16>}, {transform_indices = @transform_1, window_bounds = array<i64: 81>}, {transform_indices = @transform_2, window_bounds = array<i64: 3>}, {transform_indices = @transform_3, window_bounds = array<i64: 1, 48, 16>}]} {
    %0 = tpu.iota {dimensions = array<i32: 0>} : vector<16x1xi32>
    %1 = tpu.iota {dimensions = array<i32: 1>} : vector<1x16xi32>
    %c1_i32 = arith.constant 1 : i32
    %2 = vector.broadcast %c1_i32 : i32 to vector<16x1xi32>
    %3 = arith.cmpi sge, %0, %2 : vector<16x1xi32>
    %c14_i32 = arith.constant 14 : i32
    %4 = vector.broadcast %c14_i32 : i32 to vector<16x1xi32>
    %5 = arith.cmpi sle, %0, %4 : vector<16x1xi32>
    %c1_i32_0 = arith.constant 1 : i32
    %6 = vector.broadcast %c1_i32_0 : i32 to vector<1x16xi32>
    %7 = arith.cmpi sge, %1, %6 : vector<1x16xi32>
    %c14_i32_1 = arith.constant 14 : i32
    %8 = vector.broadcast %c14_i32_1 : i32 to vector<1x16xi32>
    %9 = arith.cmpi sle, %1, %8 : vector<1x16xi32>
    %cst = arith.constant 0.000000e+00 : f32
    %10 = vector.broadcast %cst : f32 to vector<16x16xf32>
    %cst_2 = arith.constant 0.000000e+00 : f32
    %11 = vector.broadcast %cst_2 : f32 to vector<16x16xf32>
    %cst_3 = arith.constant 0.000000e+00 : f32
    %12 = vector.broadcast %cst_3 : f32 to vector<16x16xf32>
    %c0 = arith.constant 0 : index
    %c0_4 = arith.constant 0 : index
    %c0_5 = arith.constant 0 : index
    %13 = vector.load %arg1[%c0, %c0_4, %c0_5] : memref<1x48x16xf32, #tpu.memory_space<vmem>>, vector<1x16x16xf32>
    %14 = vector.shape_cast %13 : vector<1x16x16xf32> to vector<16x16xf32>
    %c1_i32_6 = arith.constant 1 : i32
    %15 = tpu.dynamic_rotate %14 by %c1_i32_6 dim 0 : vector<16x16xf32>, i32 -> vector<16x16xf32>
    %cst_7 = arith.constant 0.000000e+00 : f32
    %16 = vector.shape_cast %3 : vector<16x1xi1> to vector<16x1xi1>
    %17 = vector.broadcast %16 : vector<16x1xi1> to vector<16x16xi1>
    %18 = vector.broadcast %cst_7 : f32 to vector<16x16xf32>
    %19 = arith.select %17, %15, %18 : vector<16x16xi1>, vector<16x16xf32>
    %c1_i32_8 = arith.constant 1 : i32
    %20 = tpu.dynamic_rotate %19 by %c1_i32_8 dim 1 : vector<16x16xf32>, i32 -> vector<16x16xf32>
    %cst_9 = arith.constant 0.000000e+00 : f32
    %21 = vector.shape_cast %7 : vector<1x16xi1> to vector<1x16xi1>
    %22 = vector.broadcast %21 : vector<1x16xi1> to vector<16x16xi1>
    %23 = vector.broadcast %cst_9 : f32 to vector<16x16xf32>
    %24 = arith.select %22, %20, %23 : vector<16x16xi1>, vector<16x16xf32>
    %c0_10 = arith.constant 0 : index
    %25 = memref.load %arg2[%c0_10] : memref<81xf32, #tpu.memory_space<smem>>
    %26 = vector.broadcast %25 : f32 to vector<16x16xf32>
    %27 = arith.mulf %24, %26 : vector<16x16xf32>
    %28 = arith.addf %10, %27 : vector<16x16xf32>
    %c27 = arith.constant 27 : index
    %29 = memref.load %arg2[%c27] : memref<81xf32, #tpu.memory_space<smem>>
    %30 = vector.broadcast %29 : f32 to vector<16x16xf32>
    %31 = arith.mulf %24, %30 : vector<16x16xf32>
    %32 = arith.addf %11, %31 : vector<16x16xf32>
    %c54 = arith.constant 54 : index
    %33 = memref.load %arg2[%c54] : memref<81xf32, #tpu.memory_space<smem>>
    %34 = vector.broadcast %33 : f32 to vector<16x16xf32>
    %35 = arith.mulf %24, %34 : vector<16x16xf32>
    %36 = arith.addf %12, %35 : vector<16x16xf32>
    %c1 = arith.constant 1 : index
    %37 = memref.load %arg2[%c1] : memref<81xf32, #tpu.memory_space<smem>>
    %38 = vector.broadcast %37 : f32 to vector<16x16xf32>
    %39 = arith.mulf %19, %38 : vector<16x16xf32>
    %40 = arith.addf %28, %39 : vector<16x16xf32>
    %c28 = arith.constant 28 : index
    %41 = memref.load %arg2[%c28] : memref<81xf32, #tpu.memory_space<smem>>
    %42 = vector.broadcast %41 : f32 to vector<16x16xf32>
    %43 = arith.mulf %19, %42 : vector<16x16xf32>
    %44 = arith.addf %32, %43 : vector<16x16xf32>
    %c55 = arith.constant 55 : index
    %45 = memref.load %arg2[%c55] : memref<81xf32, #tpu.memory_space<smem>>
    %46 = vector.broadcast %45 : f32 to vector<16x16xf32>
    %47 = arith.mulf %19, %46 : vector<16x16xf32>
    %48 = arith.addf %36, %47 : vector<16x16xf32>
    %c15_i32 = arith.constant 15 : i32
    %49 = tpu.dynamic_rotate %19 by %c15_i32 dim 1 : vector<16x16xf32>, i32 -> vector<16x16xf32>
    %cst_11 = arith.constant 0.000000e+00 : f32
    %50 = vector.shape_cast %9 : vector<1x16xi1> to vector<1x16xi1>
    %51 = vector.broadcast %50 : vector<1x16xi1> to vector<16x16xi1>
    %52 = vector.broadcast %cst_11 : f32 to vector<16x16xf32>
    %53 = arith.select %51, %49, %52 : vector<16x16xi1>, vector<16x16xf32>
    %c2 = arith.constant 2 : index
    %54 = memref.load %arg2[%c2] : memref<81xf32, #tpu.memory_space<smem>>
    %55 = vector.broadcast %54 : f32 to vector<16x16xf32>
    %56 = arith.mulf %53, %55 : vector<16x16xf32>
    %57 = arith.addf %40, %56 : vector<16x16xf32>
    %c29 = arith.constant 29 : index
    %58 = memref.load %arg2[%c29] : memref<81xf32, #tpu.memory_space<smem>>
    %59 = vector.broadcast %58 : f32 to vector<16x16xf32>
    %60 = arith.mulf %53, %59 : vector<16x16xf32>
    %61 = arith.addf %44, %60 : vector<16x16xf32>
    %c56 = arith.constant 56 : index
    %62 = memref.load %arg2[%c56] : memref<81xf32, #tpu.memory_space<smem>>
    %63 = vector.broadcast %62 : f32 to vector<16x16xf32>
    %64 = arith.mulf %53, %63 : vector<16x16xf32>
    %65 = arith.addf %48, %64 : vector<16x16xf32>
    %c1_i32_12 = arith.constant 1 : i32
    %66 = tpu.dynamic_rotate %14 by %c1_i32_12 dim 1 : vector<16x16xf32>, i32 -> vector<16x16xf32>
    %cst_13 = arith.constant 0.000000e+00 : f32
    %67 = vector.shape_cast %7 : vector<1x16xi1> to vector<1x16xi1>
    %68 = vector.broadcast %67 : vector<1x16xi1> to vector<16x16xi1>
    %69 = vector.broadcast %cst_13 : f32 to vector<16x16xf32>
    %70 = arith.select %68, %66, %69 : vector<16x16xi1>, vector<16x16xf32>
    %c3 = arith.constant 3 : index
    %71 = memref.load %arg2[%c3] : memref<81xf32, #tpu.memory_space<smem>>
    %72 = vector.broadcast %71 : f32 to vector<16x16xf32>
    %73 = arith.mulf %70, %72 : vector<16x16xf32>
    %74 = arith.addf %57, %73 : vector<16x16xf32>
    %c30 = arith.constant 30 : index
    %75 = memref.load %arg2[%c30] : memref<81xf32, #tpu.memory_space<smem>>
    %76 = vector.broadcast %75 : f32 to vector<16x16xf32>
    %77 = arith.mulf %70, %76 : vector<16x16xf32>
    %78 = arith.addf %61, %77 : vector<16x16xf32>
    %c57 = arith.constant 57 : index
    %79 = memref.load %arg2[%c57] : memref<81xf32, #tpu.memory_space<smem>>
    %80 = vector.broadcast %79 : f32 to vector<16x16xf32>
    %81 = arith.mulf %70, %80 : vector<16x16xf32>
    %82 = arith.addf %65, %81 : vector<16x16xf32>
    %c4 = arith.constant 4 : index
    %83 = memref.load %arg2[%c4] : memref<81xf32, #tpu.memory_space<smem>>
    %84 = vector.broadcast %83 : f32 to vector<16x16xf32>
    %85 = arith.mulf %14, %84 : vector<16x16xf32>
    %86 = arith.addf %74, %85 : vector<16x16xf32>
    %c31 = arith.constant 31 : index
    %87 = memref.load %arg2[%c31] : memref<81xf32, #tpu.memory_space<smem>>
    %88 = vector.broadcast %87 : f32 to vector<16x16xf32>
    %89 = arith.mulf %14, %88 : vector<16x16xf32>
    %90 = arith.addf %78, %89 : vector<16x16xf32>
    %c58 = arith.constant 58 : index
    %91 = memref.load %arg2[%c58] : memref<81xf32, #tpu.memory_space<smem>>
    %92 = vector.broadcast %91 : f32 to vector<16x16xf32>
    %93 = arith.mulf %14, %92 : vector<16x16xf32>
    %94 = arith.addf %82, %93 : vector<16x16xf32>
    %c15_i32_14 = arith.constant 15 : i32
    %95 = tpu.dynamic_rotate %14 by %c15_i32_14 dim 1 : vector<16x16xf32>, i32 -> vector<16x16xf32>
    %cst_15 = arith.constant 0.000000e+00 : f32
    %96 = vector.shape_cast %9 : vector<1x16xi1> to vector<1x16xi1>
    %97 = vector.broadcast %96 : vector<1x16xi1> to vector<16x16xi1>
    %98 = vector.broadcast %cst_15 : f32 to vector<16x16xf32>
    %99 = arith.select %97, %95, %98 : vector<16x16xi1>, vector<16x16xf32>
    %c5 = arith.constant 5 : index
    %100 = memref.load %arg2[%c5] : memref<81xf32, #tpu.memory_space<smem>>
    %101 = vector.broadcast %100 : f32 to vector<16x16xf32>
    %102 = arith.mulf %99, %101 : vector<16x16xf32>
    %103 = arith.addf %86, %102 : vector<16x16xf32>
    %c32 = arith.constant 32 : index
    %104 = memref.load %arg2[%c32] : memref<81xf32, #tpu.memory_space<smem>>
    %105 = vector.broadcast %104 : f32 to vector<16x16xf32>
    %106 = arith.mulf %99, %105 : vector<16x16xf32>
    %107 = arith.addf %90, %106 : vector<16x16xf32>
    %c59 = arith.constant 59 : index
    %108 = memref.load %arg2[%c59] : memref<81xf32, #tpu.memory_space<smem>>
    %109 = vector.broadcast %108 : f32 to vector<16x16xf32>
    %110 = arith.mulf %99, %109 : vector<16x16xf32>
    %111 = arith.addf %94, %110 : vector<16x16xf32>
    %c15_i32_16 = arith.constant 15 : i32
    %112 = tpu.dynamic_rotate %14 by %c15_i32_16 dim 0 : vector<16x16xf32>, i32 -> vector<16x16xf32>
    %cst_17 = arith.constant 0.000000e+00 : f32
    %113 = vector.shape_cast %5 : vector<16x1xi1> to vector<16x1xi1>
    %114 = vector.broadcast %113 : vector<16x1xi1> to vector<16x16xi1>
    %115 = vector.broadcast %cst_17 : f32 to vector<16x16xf32>
    %116 = arith.select %114, %112, %115 : vector<16x16xi1>, vector<16x16xf32>
    %c1_i32_18 = arith.constant 1 : i32
    %117 = tpu.dynamic_rotate %116 by %c1_i32_18 dim 1 : vector<16x16xf32>, i32 -> vector<16x16xf32>
    %cst_19 = arith.constant 0.000000e+00 : f32
    %118 = vector.shape_cast %7 : vector<1x16xi1> to vector<1x16xi1>
    %119 = vector.broadcast %118 : vector<1x16xi1> to vector<16x16xi1>
    %120 = vector.broadcast %cst_19 : f32 to vector<16x16xf32>
    %121 = arith.select %119, %117, %120 : vector<16x16xi1>, vector<16x16xf32>
    %c6 = arith.constant 6 : index
    %122 = memref.load %arg2[%c6] : memref<81xf32, #tpu.memory_space<smem>>
    %123 = vector.broadcast %122 : f32 to vector<16x16xf32>
    %124 = arith.mulf %121, %123 : vector<16x16xf32>
    %125 = arith.addf %103, %124 : vector<16x16xf32>
    %c33 = arith.constant 33 : index
    %126 = memref.load %arg2[%c33] : memref<81xf32, #tpu.memory_space<smem>>
    %127 = vector.broadcast %126 : f32 to vector<16x16xf32>
    %128 = arith.mulf %121, %127 : vector<16x16xf32>
    %129 = arith.addf %107, %128 : vector<16x16xf32>
    %c60 = arith.constant 60 : index
    %130 = memref.load %arg2[%c60] : memref<81xf32, #tpu.memory_space<smem>>
    %131 = vector.broadcast %130 : f32 to vector<16x16xf32>
    %132 = arith.mulf %121, %131 : vector<16x16xf32>
    %133 = arith.addf %111, %132 : vector<16x16xf32>
    %c7 = arith.constant 7 : index
    %134 = memref.load %arg2[%c7] : memref<81xf32, #tpu.memory_space<smem>>
    %135 = vector.broadcast %134 : f32 to vector<16x16xf32>
    %136 = arith.mulf %116, %135 : vector<16x16xf32>
    %137 = arith.addf %125, %136 : vector<16x16xf32>
    %c34 = arith.constant 34 : index
    %138 = memref.load %arg2[%c34] : memref<81xf32, #tpu.memory_space<smem>>
    %139 = vector.broadcast %138 : f32 to vector<16x16xf32>
    %140 = arith.mulf %116, %139 : vector<16x16xf32>
    %141 = arith.addf %129, %140 : vector<16x16xf32>
    %c61 = arith.constant 61 : index
    %142 = memref.load %arg2[%c61] : memref<81xf32, #tpu.memory_space<smem>>
    %143 = vector.broadcast %142 : f32 to vector<16x16xf32>
    %144 = arith.mulf %116, %143 : vector<16x16xf32>
    %145 = arith.addf %133, %144 : vector<16x16xf32>
    %c15_i32_20 = arith.constant 15 : i32
    %146 = tpu.dynamic_rotate %116 by %c15_i32_20 dim 1 : vector<16x16xf32>, i32 -> vector<16x16xf32>
    %cst_21 = arith.constant 0.000000e+00 : f32
    %147 = vector.shape_cast %9 : vector<1x16xi1> to vector<1x16xi1>
    %148 = vector.broadcast %147 : vector<1x16xi1> to vector<16x16xi1>
    %149 = vector.broadcast %cst_21 : f32 to vector<16x16xf32>
    %150 = arith.select %148, %146, %149 : vector<16x16xi1>, vector<16x16xf32>
    %c8 = arith.constant 8 : index
    %151 = memref.load %arg2[%c8] : memref<81xf32, #tpu.memory_space<smem>>
    %152 = vector.broadcast %151 : f32 to vector<16x16xf32>
    %153 = arith.mulf %150, %152 : vector<16x16xf32>
    %154 = arith.addf %137, %153 : vector<16x16xf32>
    %c35 = arith.constant 35 : index
    %155 = memref.load %arg2[%c35] : memref<81xf32, #tpu.memory_space<smem>>
    %156 = vector.broadcast %155 : f32 to vector<16x16xf32>
    %157 = arith.mulf %150, %156 : vector<16x16xf32>
    %158 = arith.addf %141, %157 : vector<16x16xf32>
    %c62 = arith.constant 62 : index
    %159 = memref.load %arg2[%c62] : memref<81xf32, #tpu.memory_space<smem>>
    %160 = vector.broadcast %159 : f32 to vector<16x16xf32>
    %161 = arith.mulf %150, %160 : vector<16x16xf32>
    %162 = arith.addf %145, %161 : vector<16x16xf32>
    %c0_22 = arith.constant 0 : index
    %c16 = arith.constant 16 : index
    %c0_23 = arith.constant 0 : index
    %163 = vector.load %arg1[%c0_22, %c16, %c0_23] : memref<1x48x16xf32, #tpu.memory_space<vmem>>, vector<1x16x16xf32>
    %164 = vector.shape_cast %163 : vector<1x16x16xf32> to vector<16x16xf32>
    %c1_i32_24 = arith.constant 1 : i32
    %165 = tpu.dynamic_rotate %164 by %c1_i32_24 dim 0 : vector<16x16xf32>, i32 -> vector<16x16xf32>
    %cst_25 = arith.constant 0.000000e+00 : f32
    %166 = vector.shape_cast %3 : vector<16x1xi1> to vector<16x1xi1>
    %167 = vector.broadcast %166 : vector<16x1xi1> to vector<16x16xi1>
    %168 = vector.broadcast %cst_25 : f32 to vector<16x16xf32>
    %169 = arith.select %167, %165, %168 : vector<16x16xi1>, vector<16x16xf32>
    %c1_i32_26 = arith.constant 1 : i32
    %170 = tpu.dynamic_rotate %169 by %c1_i32_26 dim 1 : vector<16x16xf32>, i32 -> vector<16x16xf32>
    %cst_27 = arith.constant 0.000000e+00 : f32
    %171 = vector.shape_cast %7 : vector<1x16xi1> to vector<1x16xi1>
    %172 = vector.broadcast %171 : vector<1x16xi1> to vector<16x16xi1>
    %173 = vector.broadcast %cst_27 : f32 to vector<16x16xf32>
    %174 = arith.select %172, %170, %173 : vector<16x16xi1>, vector<16x16xf32>
    %c9 = arith.constant 9 : index
    %175 = memref.load %arg2[%c9] : memref<81xf32, #tpu.memory_space<smem>>
    %176 = vector.broadcast %175 : f32 to vector<16x16xf32>
    %177 = arith.mulf %174, %176 : vector<16x16xf32>
    %178 = arith.addf %154, %177 : vector<16x16xf32>
    %c36 = arith.constant 36 : index
    %179 = memref.load %arg2[%c36] : memref<81xf32, #tpu.memory_space<smem>>
    %180 = vector.broadcast %179 : f32 to vector<16x16xf32>
    %181 = arith.mulf %174, %180 : vector<16x16xf32>
    %182 = arith.addf %158, %181 : vector<16x16xf32>
    %c63 = arith.constant 63 : index
    %183 = memref.load %arg2[%c63] : memref<81xf32, #tpu.memory_space<smem>>
    %184 = vector.broadcast %183 : f32 to vector<16x16xf32>
    %185 = arith.mulf %174, %184 : vector<16x16xf32>
    %186 = arith.addf %162, %185 : vector<16x16xf32>
    %c10 = arith.constant 10 : index
    %187 = memref.load %arg2[%c10] : memref<81xf32, #tpu.memory_space<smem>>
    %188 = vector.broadcast %187 : f32 to vector<16x16xf32>
    %189 = arith.mulf %169, %188 : vector<16x16xf32>
    %190 = arith.addf %178, %189 : vector<16x16xf32>
    %c37 = arith.constant 37 : index
    %191 = memref.load %arg2[%c37] : memref<81xf32, #tpu.memory_space<smem>>
    %192 = vector.broadcast %191 : f32 to vector<16x16xf32>
    %193 = arith.mulf %169, %192 : vector<16x16xf32>
    %194 = arith.addf %182, %193 : vector<16x16xf32>
    %c64 = arith.constant 64 : index
    %195 = memref.load %arg2[%c64] : memref<81xf32, #tpu.memory_space<smem>>
    %196 = vector.broadcast %195 : f32 to vector<16x16xf32>
    %197 = arith.mulf %169, %196 : vector<16x16xf32>
    %198 = arith.addf %186, %197 : vector<16x16xf32>
    %c15_i32_28 = arith.constant 15 : i32
    %199 = tpu.dynamic_rotate %169 by %c15_i32_28 dim 1 : vector<16x16xf32>, i32 -> vector<16x16xf32>
    %cst_29 = arith.constant 0.000000e+00 : f32
    %200 = vector.shape_cast %9 : vector<1x16xi1> to vector<1x16xi1>
    %201 = vector.broadcast %200 : vector<1x16xi1> to vector<16x16xi1>
    %202 = vector.broadcast %cst_29 : f32 to vector<16x16xf32>
    %203 = arith.select %201, %199, %202 : vector<16x16xi1>, vector<16x16xf32>
    %c11 = arith.constant 11 : index
    %204 = memref.load %arg2[%c11] : memref<81xf32, #tpu.memory_space<smem>>
    %205 = vector.broadcast %204 : f32 to vector<16x16xf32>
    %206 = arith.mulf %203, %205 : vector<16x16xf32>
    %207 = arith.addf %190, %206 : vector<16x16xf32>
    %c38 = arith.constant 38 : index
    %208 = memref.load %arg2[%c38] : memref<81xf32, #tpu.memory_space<smem>>
    %209 = vector.broadcast %208 : f32 to vector<16x16xf32>
    %210 = arith.mulf %203, %209 : vector<16x16xf32>
    %211 = arith.addf %194, %210 : vector<16x16xf32>
    %c65 = arith.constant 65 : index
    %212 = memref.load %arg2[%c65] : memref<81xf32, #tpu.memory_space<smem>>
    %213 = vector.broadcast %212 : f32 to vector<16x16xf32>
    %214 = arith.mulf %203, %213 : vector<16x16xf32>
    %215 = arith.addf %198, %214 : vector<16x16xf32>
    %c1_i32_30 = arith.constant 1 : i32
    %216 = tpu.dynamic_rotate %164 by %c1_i32_30 dim 1 : vector<16x16xf32>, i32 -> vector<16x16xf32>
    %cst_31 = arith.constant 0.000000e+00 : f32
    %217 = vector.shape_cast %7 : vector<1x16xi1> to vector<1x16xi1>
    %218 = vector.broadcast %217 : vector<1x16xi1> to vector<16x16xi1>
    %219 = vector.broadcast %cst_31 : f32 to vector<16x16xf32>
    %220 = arith.select %218, %216, %219 : vector<16x16xi1>, vector<16x16xf32>
    %c12 = arith.constant 12 : index
    %221 = memref.load %arg2[%c12] : memref<81xf32, #tpu.memory_space<smem>>
    %222 = vector.broadcast %221 : f32 to vector<16x16xf32>
    %223 = arith.mulf %220, %222 : vector<16x16xf32>
    %224 = arith.addf %207, %223 : vector<16x16xf32>
    %c39 = arith.constant 39 : index
    %225 = memref.load %arg2[%c39] : memref<81xf32, #tpu.memory_space<smem>>
    %226 = vector.broadcast %225 : f32 to vector<16x16xf32>
    %227 = arith.mulf %220, %226 : vector<16x16xf32>
    %228 = arith.addf %211, %227 : vector<16x16xf32>
    %c66 = arith.constant 66 : index
    %229 = memref.load %arg2[%c66] : memref<81xf32, #tpu.memory_space<smem>>
    %230 = vector.broadcast %229 : f32 to vector<16x16xf32>
    %231 = arith.mulf %220, %230 : vector<16x16xf32>
    %232 = arith.addf %215, %231 : vector<16x16xf32>
    %c13 = arith.constant 13 : index
    %233 = memref.load %arg2[%c13] : memref<81xf32, #tpu.memory_space<smem>>
    %234 = vector.broadcast %233 : f32 to vector<16x16xf32>
    %235 = arith.mulf %164, %234 : vector<16x16xf32>
    %236 = arith.addf %224, %235 : vector<16x16xf32>
    %c40 = arith.constant 40 : index
    %237 = memref.load %arg2[%c40] : memref<81xf32, #tpu.memory_space<smem>>
    %238 = vector.broadcast %237 : f32 to vector<16x16xf32>
    %239 = arith.mulf %164, %238 : vector<16x16xf32>
    %240 = arith.addf %228, %239 : vector<16x16xf32>
    %c67 = arith.constant 67 : index
    %241 = memref.load %arg2[%c67] : memref<81xf32, #tpu.memory_space<smem>>
    %242 = vector.broadcast %241 : f32 to vector<16x16xf32>
    %243 = arith.mulf %164, %242 : vector<16x16xf32>
    %244 = arith.addf %232, %243 : vector<16x16xf32>
    %c15_i32_32 = arith.constant 15 : i32
    %245 = tpu.dynamic_rotate %164 by %c15_i32_32 dim 1 : vector<16x16xf32>, i32 -> vector<16x16xf32>
    %cst_33 = arith.constant 0.000000e+00 : f32
    %246 = vector.shape_cast %9 : vector<1x16xi1> to vector<1x16xi1>
    %247 = vector.broadcast %246 : vector<1x16xi1> to vector<16x16xi1>
    %248 = vector.broadcast %cst_33 : f32 to vector<16x16xf32>
    %249 = arith.select %247, %245, %248 : vector<16x16xi1>, vector<16x16xf32>
    %c14 = arith.constant 14 : index
    %250 = memref.load %arg2[%c14] : memref<81xf32, #tpu.memory_space<smem>>
    %251 = vector.broadcast %250 : f32 to vector<16x16xf32>
    %252 = arith.mulf %249, %251 : vector<16x16xf32>
    %253 = arith.addf %236, %252 : vector<16x16xf32>
    %c41 = arith.constant 41 : index
    %254 = memref.load %arg2[%c41] : memref<81xf32, #tpu.memory_space<smem>>
    %255 = vector.broadcast %254 : f32 to vector<16x16xf32>
    %256 = arith.mulf %249, %255 : vector<16x16xf32>
    %257 = arith.addf %240, %256 : vector<16x16xf32>
    %c68 = arith.constant 68 : index
    %258 = memref.load %arg2[%c68] : memref<81xf32, #tpu.memory_space<smem>>
    %259 = vector.broadcast %258 : f32 to vector<16x16xf32>
    %260 = arith.mulf %249, %259 : vector<16x16xf32>
    %261 = arith.addf %244, %260 : vector<16x16xf32>
    %c15_i32_34 = arith.constant 15 : i32
    %262 = tpu.dynamic_rotate %164 by %c15_i32_34 dim 0 : vector<16x16xf32>, i32 -> vector<16x16xf32>
    %cst_35 = arith.constant 0.000000e+00 : f32
    %263 = vector.shape_cast %5 : vector<16x1xi1> to vector<16x1xi1>
    %264 = vector.broadcast %263 : vector<16x1xi1> to vector<16x16xi1>
    %265 = vector.broadcast %cst_35 : f32 to vector<16x16xf32>
    %266 = arith.select %264, %262, %265 : vector<16x16xi1>, vector<16x16xf32>
    %c1_i32_36 = arith.constant 1 : i32
    %267 = tpu.dynamic_rotate %266 by %c1_i32_36 dim 1 : vector<16x16xf32>, i32 -> vector<16x16xf32>
    %cst_37 = arith.constant 0.000000e+00 : f32
    %268 = vector.shape_cast %7 : vector<1x16xi1> to vector<1x16xi1>
    %269 = vector.broadcast %268 : vector<1x16xi1> to vector<16x16xi1>
    %270 = vector.broadcast %cst_37 : f32 to vector<16x16xf32>
    %271 = arith.select %269, %267, %270 : vector<16x16xi1>, vector<16x16xf32>
    %c15 = arith.constant 15 : index
    %272 = memref.load %arg2[%c15] : memref<81xf32, #tpu.memory_space<smem>>
    %273 = vector.broadcast %272 : f32 to vector<16x16xf32>
    %274 = arith.mulf %271, %273 : vector<16x16xf32>
    %275 = arith.addf %253, %274 : vector<16x16xf32>
    %c42 = arith.constant 42 : index
    %276 = memref.load %arg2[%c42] : memref<81xf32, #tpu.memory_space<smem>>
    %277 = vector.broadcast %276 : f32 to vector<16x16xf32>
    %278 = arith.mulf %271, %277 : vector<16x16xf32>
    %279 = arith.addf %257, %278 : vector<16x16xf32>
    %c69 = arith.constant 69 : index
    %280 = memref.load %arg2[%c69] : memref<81xf32, #tpu.memory_space<smem>>
    %281 = vector.broadcast %280 : f32 to vector<16x16xf32>
    %282 = arith.mulf %271, %281 : vector<16x16xf32>
    %283 = arith.addf %261, %282 : vector<16x16xf32>
    %c16_38 = arith.constant 16 : index
    %284 = memref.load %arg2[%c16_38] : memref<81xf32, #tpu.memory_space<smem>>
    %285 = vector.broadcast %284 : f32 to vector<16x16xf32>
    %286 = arith.mulf %266, %285 : vector<16x16xf32>
    %287 = arith.addf %275, %286 : vector<16x16xf32>
    %c43 = arith.constant 43 : index
    %288 = memref.load %arg2[%c43] : memref<81xf32, #tpu.memory_space<smem>>
    %289 = vector.broadcast %288 : f32 to vector<16x16xf32>
    %290 = arith.mulf %266, %289 : vector<16x16xf32>
    %291 = arith.addf %279, %290 : vector<16x16xf32>
    %c70 = arith.constant 70 : index
    %292 = memref.load %arg2[%c70] : memref<81xf32, #tpu.memory_space<smem>>
    %293 = vector.broadcast %292 : f32 to vector<16x16xf32>
    %294 = arith.mulf %266, %293 : vector<16x16xf32>
    %295 = arith.addf %283, %294 : vector<16x16xf32>
    %c15_i32_39 = arith.constant 15 : i32
    %296 = tpu.dynamic_rotate %266 by %c15_i32_39 dim 1 : vector<16x16xf32>, i32 -> vector<16x16xf32>
    %cst_40 = arith.constant 0.000000e+00 : f32
    %297 = vector.shape_cast %9 : vector<1x16xi1> to vector<1x16xi1>
    %298 = vector.broadcast %297 : vector<1x16xi1> to vector<16x16xi1>
    %299 = vector.broadcast %cst_40 : f32 to vector<16x16xf32>
    %300 = arith.select %298, %296, %299 : vector<16x16xi1>, vector<16x16xf32>
    %c17 = arith.constant 17 : index
    %301 = memref.load %arg2[%c17] : memref<81xf32, #tpu.memory_space<smem>>
    %302 = vector.broadcast %301 : f32 to vector<16x16xf32>
    %303 = arith.mulf %300, %302 : vector<16x16xf32>
    %304 = arith.addf %287, %303 : vector<16x16xf32>
    %c44 = arith.constant 44 : index
    %305 = memref.load %arg2[%c44] : memref<81xf32, #tpu.memory_space<smem>>
    %306 = vector.broadcast %305 : f32 to vector<16x16xf32>
    %307 = arith.mulf %300, %306 : vector<16x16xf32>
    %308 = arith.addf %291, %307 : vector<16x16xf32>
    %c71 = arith.constant 71 : index
    %309 = memref.load %arg2[%c71] : memref<81xf32, #tpu.memory_space<smem>>
    %310 = vector.broadcast %309 : f32 to vector<16x16xf32>
    %311 = arith.mulf %300, %310 : vector<16x16xf32>
    %312 = arith.addf %295, %311 : vector<16x16xf32>
    %c0_41 = arith.constant 0 : index
    %c32_42 = arith.constant 32 : index
    %c0_43 = arith.constant 0 : index
    %313 = vector.load %arg1[%c0_41, %c32_42, %c0_43] : memref<1x48x16xf32, #tpu.memory_space<vmem>>, vector<1x16x16xf32>
    %314 = vector.shape_cast %313 : vector<1x16x16xf32> to vector<16x16xf32>
    %c1_i32_44 = arith.constant 1 : i32
    %315 = tpu.dynamic_rotate %314 by %c1_i32_44 dim 0 : vector<16x16xf32>, i32 -> vector<16x16xf32>
    %cst_45 = arith.constant 0.000000e+00 : f32
    %316 = vector.shape_cast %3 : vector<16x1xi1> to vector<16x1xi1>
    %317 = vector.broadcast %316 : vector<16x1xi1> to vector<16x16xi1>
    %318 = vector.broadcast %cst_45 : f32 to vector<16x16xf32>
    %319 = arith.select %317, %315, %318 : vector<16x16xi1>, vector<16x16xf32>
    %c1_i32_46 = arith.constant 1 : i32
    %320 = tpu.dynamic_rotate %319 by %c1_i32_46 dim 1 : vector<16x16xf32>, i32 -> vector<16x16xf32>
    %cst_47 = arith.constant 0.000000e+00 : f32
    %321 = vector.shape_cast %7 : vector<1x16xi1> to vector<1x16xi1>
    %322 = vector.broadcast %321 : vector<1x16xi1> to vector<16x16xi1>
    %323 = vector.broadcast %cst_47 : f32 to vector<16x16xf32>
    %324 = arith.select %322, %320, %323 : vector<16x16xi1>, vector<16x16xf32>
    %c18 = arith.constant 18 : index
    %325 = memref.load %arg2[%c18] : memref<81xf32, #tpu.memory_space<smem>>
    %326 = vector.broadcast %325 : f32 to vector<16x16xf32>
    %327 = arith.mulf %324, %326 : vector<16x16xf32>
    %328 = arith.addf %304, %327 : vector<16x16xf32>
    %c45 = arith.constant 45 : index
    %329 = memref.load %arg2[%c45] : memref<81xf32, #tpu.memory_space<smem>>
    %330 = vector.broadcast %329 : f32 to vector<16x16xf32>
    %331 = arith.mulf %324, %330 : vector<16x16xf32>
    %332 = arith.addf %308, %331 : vector<16x16xf32>
    %c72 = arith.constant 72 : index
    %333 = memref.load %arg2[%c72] : memref<81xf32, #tpu.memory_space<smem>>
    %334 = vector.broadcast %333 : f32 to vector<16x16xf32>
    %335 = arith.mulf %324, %334 : vector<16x16xf32>
    %336 = arith.addf %312, %335 : vector<16x16xf32>
    %c19 = arith.constant 19 : index
    %337 = memref.load %arg2[%c19] : memref<81xf32, #tpu.memory_space<smem>>
    %338 = vector.broadcast %337 : f32 to vector<16x16xf32>
    %339 = arith.mulf %319, %338 : vector<16x16xf32>
    %340 = arith.addf %328, %339 : vector<16x16xf32>
    %c46 = arith.constant 46 : index
    %341 = memref.load %arg2[%c46] : memref<81xf32, #tpu.memory_space<smem>>
    %342 = vector.broadcast %341 : f32 to vector<16x16xf32>
    %343 = arith.mulf %319, %342 : vector<16x16xf32>
    %344 = arith.addf %332, %343 : vector<16x16xf32>
    %c73 = arith.constant 73 : index
    %345 = memref.load %arg2[%c73] : memref<81xf32, #tpu.memory_space<smem>>
    %346 = vector.broadcast %345 : f32 to vector<16x16xf32>
    %347 = arith.mulf %319, %346 : vector<16x16xf32>
    %348 = arith.addf %336, %347 : vector<16x16xf32>
    %c15_i32_48 = arith.constant 15 : i32
    %349 = tpu.dynamic_rotate %319 by %c15_i32_48 dim 1 : vector<16x16xf32>, i32 -> vector<16x16xf32>
    %cst_49 = arith.constant 0.000000e+00 : f32
    %350 = vector.shape_cast %9 : vector<1x16xi1> to vector<1x16xi1>
    %351 = vector.broadcast %350 : vector<1x16xi1> to vector<16x16xi1>
    %352 = vector.broadcast %cst_49 : f32 to vector<16x16xf32>
    %353 = arith.select %351, %349, %352 : vector<16x16xi1>, vector<16x16xf32>
    %c20 = arith.constant 20 : index
    %354 = memref.load %arg2[%c20] : memref<81xf32, #tpu.memory_space<smem>>
    %355 = vector.broadcast %354 : f32 to vector<16x16xf32>
    %356 = arith.mulf %353, %355 : vector<16x16xf32>
    %357 = arith.addf %340, %356 : vector<16x16xf32>
    %c47 = arith.constant 47 : index
    %358 = memref.load %arg2[%c47] : memref<81xf32, #tpu.memory_space<smem>>
    %359 = vector.broadcast %358 : f32 to vector<16x16xf32>
    %360 = arith.mulf %353, %359 : vector<16x16xf32>
    %361 = arith.addf %344, %360 : vector<16x16xf32>
    %c74 = arith.constant 74 : index
    %362 = memref.load %arg2[%c74] : memref<81xf32, #tpu.memory_space<smem>>
    %363 = vector.broadcast %362 : f32 to vector<16x16xf32>
    %364 = arith.mulf %353, %363 : vector<16x16xf32>
    %365 = arith.addf %348, %364 : vector<16x16xf32>
    %c1_i32_50 = arith.constant 1 : i32
    %366 = tpu.dynamic_rotate %314 by %c1_i32_50 dim 1 : vector<16x16xf32>, i32 -> vector<16x16xf32>
    %cst_51 = arith.constant 0.000000e+00 : f32
    %367 = vector.shape_cast %7 : vector<1x16xi1> to vector<1x16xi1>
    %368 = vector.broadcast %367 : vector<1x16xi1> to vector<16x16xi1>
    %369 = vector.broadcast %cst_51 : f32 to vector<16x16xf32>
    %370 = arith.select %368, %366, %369 : vector<16x16xi1>, vector<16x16xf32>
    %c21 = arith.constant 21 : index
    %371 = memref.load %arg2[%c21] : memref<81xf32, #tpu.memory_space<smem>>
    %372 = vector.broadcast %371 : f32 to vector<16x16xf32>
    %373 = arith.mulf %370, %372 : vector<16x16xf32>
    %374 = arith.addf %357, %373 : vector<16x16xf32>
    %c48 = arith.constant 48 : index
    %375 = memref.load %arg2[%c48] : memref<81xf32, #tpu.memory_space<smem>>
    %376 = vector.broadcast %375 : f32 to vector<16x16xf32>
    %377 = arith.mulf %370, %376 : vector<16x16xf32>
    %378 = arith.addf %361, %377 : vector<16x16xf32>
    %c75 = arith.constant 75 : index
    %379 = memref.load %arg2[%c75] : memref<81xf32, #tpu.memory_space<smem>>
    %380 = vector.broadcast %379 : f32 to vector<16x16xf32>
    %381 = arith.mulf %370, %380 : vector<16x16xf32>
    %382 = arith.addf %365, %381 : vector<16x16xf32>
    %c22 = arith.constant 22 : index
    %383 = memref.load %arg2[%c22] : memref<81xf32, #tpu.memory_space<smem>>
    %384 = vector.broadcast %383 : f32 to vector<16x16xf32>
    %385 = arith.mulf %314, %384 : vector<16x16xf32>
    %386 = arith.addf %374, %385 : vector<16x16xf32>
    %c49 = arith.constant 49 : index
    %387 = memref.load %arg2[%c49] : memref<81xf32, #tpu.memory_space<smem>>
    %388 = vector.broadcast %387 : f32 to vector<16x16xf32>
    %389 = arith.mulf %314, %388 : vector<16x16xf32>
    %390 = arith.addf %378, %389 : vector<16x16xf32>
    %c76 = arith.constant 76 : index
    %391 = memref.load %arg2[%c76] : memref<81xf32, #tpu.memory_space<smem>>
    %392 = vector.broadcast %391 : f32 to vector<16x16xf32>
    %393 = arith.mulf %314, %392 : vector<16x16xf32>
    %394 = arith.addf %382, %393 : vector<16x16xf32>
    %c15_i32_52 = arith.constant 15 : i32
    %395 = tpu.dynamic_rotate %314 by %c15_i32_52 dim 1 : vector<16x16xf32>, i32 -> vector<16x16xf32>
    %cst_53 = arith.constant 0.000000e+00 : f32
    %396 = vector.shape_cast %9 : vector<1x16xi1> to vector<1x16xi1>
    %397 = vector.broadcast %396 : vector<1x16xi1> to vector<16x16xi1>
    %398 = vector.broadcast %cst_53 : f32 to vector<16x16xf32>
    %399 = arith.select %397, %395, %398 : vector<16x16xi1>, vector<16x16xf32>
    %c23 = arith.constant 23 : index
    %400 = memref.load %arg2[%c23] : memref<81xf32, #tpu.memory_space<smem>>
    %401 = vector.broadcast %400 : f32 to vector<16x16xf32>
    %402 = arith.mulf %399, %401 : vector<16x16xf32>
    %403 = arith.addf %386, %402 : vector<16x16xf32>
    %c50 = arith.constant 50 : index
    %404 = memref.load %arg2[%c50] : memref<81xf32, #tpu.memory_space<smem>>
    %405 = vector.broadcast %404 : f32 to vector<16x16xf32>
    %406 = arith.mulf %399, %405 : vector<16x16xf32>
    %407 = arith.addf %390, %406 : vector<16x16xf32>
    %c77 = arith.constant 77 : index
    %408 = memref.load %arg2[%c77] : memref<81xf32, #tpu.memory_space<smem>>
    %409 = vector.broadcast %408 : f32 to vector<16x16xf32>
    %410 = arith.mulf %399, %409 : vector<16x16xf32>
    %411 = arith.addf %394, %410 : vector<16x16xf32>
    %c15_i32_54 = arith.constant 15 : i32
    %412 = tpu.dynamic_rotate %314 by %c15_i32_54 dim 0 : vector<16x16xf32>, i32 -> vector<16x16xf32>
    %cst_55 = arith.constant 0.000000e+00 : f32
    %413 = vector.shape_cast %5 : vector<16x1xi1> to vector<16x1xi1>
    %414 = vector.broadcast %413 : vector<16x1xi1> to vector<16x16xi1>
    %415 = vector.broadcast %cst_55 : f32 to vector<16x16xf32>
    %416 = arith.select %414, %412, %415 : vector<16x16xi1>, vector<16x16xf32>
    %c1_i32_56 = arith.constant 1 : i32
    %417 = tpu.dynamic_rotate %416 by %c1_i32_56 dim 1 : vector<16x16xf32>, i32 -> vector<16x16xf32>
    %cst_57 = arith.constant 0.000000e+00 : f32
    %418 = vector.shape_cast %7 : vector<1x16xi1> to vector<1x16xi1>
    %419 = vector.broadcast %418 : vector<1x16xi1> to vector<16x16xi1>
    %420 = vector.broadcast %cst_57 : f32 to vector<16x16xf32>
    %421 = arith.select %419, %417, %420 : vector<16x16xi1>, vector<16x16xf32>
    %c24 = arith.constant 24 : index
    %422 = memref.load %arg2[%c24] : memref<81xf32, #tpu.memory_space<smem>>
    %423 = vector.broadcast %422 : f32 to vector<16x16xf32>
    %424 = arith.mulf %421, %423 : vector<16x16xf32>
    %425 = arith.addf %403, %424 : vector<16x16xf32>
    %c51 = arith.constant 51 : index
    %426 = memref.load %arg2[%c51] : memref<81xf32, #tpu.memory_space<smem>>
    %427 = vector.broadcast %426 : f32 to vector<16x16xf32>
    %428 = arith.mulf %421, %427 : vector<16x16xf32>
    %429 = arith.addf %407, %428 : vector<16x16xf32>
    %c78 = arith.constant 78 : index
    %430 = memref.load %arg2[%c78] : memref<81xf32, #tpu.memory_space<smem>>
    %431 = vector.broadcast %430 : f32 to vector<16x16xf32>
    %432 = arith.mulf %421, %431 : vector<16x16xf32>
    %433 = arith.addf %411, %432 : vector<16x16xf32>
    %c25 = arith.constant 25 : index
    %434 = memref.load %arg2[%c25] : memref<81xf32, #tpu.memory_space<smem>>
    %435 = vector.broadcast %434 : f32 to vector<16x16xf32>
    %436 = arith.mulf %416, %435 : vector<16x16xf32>
    %437 = arith.addf %425, %436 : vector<16x16xf32>
    %c52 = arith.constant 52 : index
    %438 = memref.load %arg2[%c52] : memref<81xf32, #tpu.memory_space<smem>>
    %439 = vector.broadcast %438 : f32 to vector<16x16xf32>
    %440 = arith.mulf %416, %439 : vector<16x16xf32>
    %441 = arith.addf %429, %440 : vector<16x16xf32>
    %c79 = arith.constant 79 : index
    %442 = memref.load %arg2[%c79] : memref<81xf32, #tpu.memory_space<smem>>
    %443 = vector.broadcast %442 : f32 to vector<16x16xf32>
    %444 = arith.mulf %416, %443 : vector<16x16xf32>
    %445 = arith.addf %433, %444 : vector<16x16xf32>
    %c15_i32_58 = arith.constant 15 : i32
    %446 = tpu.dynamic_rotate %416 by %c15_i32_58 dim 1 : vector<16x16xf32>, i32 -> vector<16x16xf32>
    %cst_59 = arith.constant 0.000000e+00 : f32
    %447 = vector.shape_cast %9 : vector<1x16xi1> to vector<1x16xi1>
    %448 = vector.broadcast %447 : vector<1x16xi1> to vector<16x16xi1>
    %449 = vector.broadcast %cst_59 : f32 to vector<16x16xf32>
    %450 = arith.select %448, %446, %449 : vector<16x16xi1>, vector<16x16xf32>
    %c26 = arith.constant 26 : index
    %451 = memref.load %arg2[%c26] : memref<81xf32, #tpu.memory_space<smem>>
    %452 = vector.broadcast %451 : f32 to vector<16x16xf32>
    %453 = arith.mulf %450, %452 : vector<16x16xf32>
    %454 = arith.addf %437, %453 : vector<16x16xf32>
    %c53 = arith.constant 53 : index
    %455 = memref.load %arg2[%c53] : memref<81xf32, #tpu.memory_space<smem>>
    %456 = vector.broadcast %455 : f32 to vector<16x16xf32>
    %457 = arith.mulf %450, %456 : vector<16x16xf32>
    %458 = arith.addf %441, %457 : vector<16x16xf32>
    %c80 = arith.constant 80 : index
    %459 = memref.load %arg2[%c80] : memref<81xf32, #tpu.memory_space<smem>>
    %460 = vector.broadcast %459 : f32 to vector<16x16xf32>
    %461 = arith.mulf %450, %460 : vector<16x16xf32>
    %462 = arith.addf %445, %461 : vector<16x16xf32>
    %c0_60 = arith.constant 0 : index
    %463 = memref.load %arg3[%c0_60] : memref<3xf32, #tpu.memory_space<smem>>
    %464 = vector.broadcast %463 : f32 to vector<16x16xf32>
    %465 = arith.addf %454, %464 : vector<16x16xf32>
    %cst_61 = arith.constant 0.000000e+00 : f32
    %466 = vector.broadcast %cst_61 : f32 to vector<16x16xf32>
    %467 = arith.maximumf %465, %466 : vector<16x16xf32>
    %c0_62 = arith.constant 0 : index
    %c0_63 = arith.constant 0 : index
    %c0_64 = arith.constant 0 : index
    %468 = vector.load %arg4[%c0_62, %c0_63, %c0_64] : memref<1x48x16xf32, #tpu.memory_space<vmem>>, vector<1x16x16xf32>
    %469 = vector.shape_cast %468 : vector<1x16x16xf32> to vector<16x16xf32>
    %470 = vector.shape_cast %467 : vector<16x16xf32> to vector<1x16x16xf32>
    tpu.vector_store %arg4[%c0_62, %c0_63, %c0_64], %470 {strides = array<i32>} : memref<1x48x16xf32, #tpu.memory_space<vmem>>, vector<1x16x16xf32>,
    %c1_65 = arith.constant 1 : index
    %471 = memref.load %arg3[%c1_65] : memref<3xf32, #tpu.memory_space<smem>>
    %472 = vector.broadcast %471 : f32 to vector<16x16xf32>
    %473 = arith.addf %458, %472 : vector<16x16xf32>
    %cst_66 = arith.constant 0.000000e+00 : f32
    %474 = vector.broadcast %cst_66 : f32 to vector<16x16xf32>
    %475 = arith.maximumf %473, %474 : vector<16x16xf32>
    %c0_67 = arith.constant 0 : index
    %c16_68 = arith.constant 16 : index
    %c0_69 = arith.constant 0 : index
    %476 = vector.load %arg4[%c0_67, %c16_68, %c0_69] : memref<1x48x16xf32, #tpu.memory_space<vmem>>, vector<1x16x16xf32>
    %477 = vector.shape_cast %476 : vector<1x16x16xf32> to vector<16x16xf32>
    %478 = vector.shape_cast %475 : vector<16x16xf32> to vector<1x16x16xf32>
    tpu.vector_store %arg4[%c0_67, %c16_68, %c0_69], %478 {strides = array<i32>} : memref<1x48x16xf32, #tpu.memory_space<vmem>>, vector<1x16x16xf32>,
    %c2_70 = arith.constant 2 : index
    %479 = memref.load %arg3[%c2_70] : memref<3xf32, #tpu.memory_space<smem>>
    %480 = vector.broadcast %479 : f32 to vector<16x16xf32>
    %481 = arith.addf %462, %480 : vector<16x16xf32>
    %cst_71 = arith.constant 0.000000e+00 : f32
    %482 = vector.broadcast %cst_71 : f32 to vector<16x16xf32>
    %483 = arith.maximumf %481, %482 : vector<16x16xf32>
    %c0_72 = arith.constant 0 : index
    %c32_73 = arith.constant 32 : index
    %c0_74 = arith.constant 0 : index
    %484 = vector.load %arg4[%c0_72, %c32_73, %c0_74] : memref<1x48x16xf32, #tpu.memory_space<vmem>>, vector<1x16x16xf32>
    %485 = vector.shape_cast %484 : vector<1x16x16xf32> to vector<16x16xf32>
    %486 = vector.shape_cast %483 : vector<16x16xf32> to vector<1x16x16xf32>
    tpu.vector_store %arg4[%c0_72, %c32_73, %c0_74], %486 {strides = array<i32>} : memref<1x48x16xf32, #tpu.memory_space<vmem>>, vector<1x16x16xf32>,
    return
  }
  func.func @transform_0(%arg0: i32) -> (i32, i32, i32) {
    %c0_i32 = arith.constant 0 : i32
    %c0_i32_0 = arith.constant 0 : i32
    %c0_i32_1 = arith.constant 0 : i32
    return %arg0, %c0_i32, %c0_i32_0 : i32, i32, i32
  }
  func.func @transform_1(%arg0: i32) -> i32 {
    %c0_i32 = arith.constant 0 : i32
    %c0_i32_0 = arith.constant 0 : i32
    return %c0_i32 : i32
  }
  func.func @transform_2(%arg0: i32) -> i32 {
    %c0_i32 = arith.constant 0 : i32
    %c0_i32_0 = arith.constant 0 : i32
    return %c0_i32 : i32
  }
  func.func @transform_3(%arg0: i32) -> (i32, i32, i32) {
    %c0_i32 = arith.constant 0 : i32
    %c0_i32_0 = arith.constant 0 : i32
    %c0_i32_1 = arith.constant 0 : i32
    return %arg0, %c0_i32, %c0_i32_0 : i32, i32, i32
  }
}

</mosaic_0001>

<llo_original>
// kernel: tpu_custom_call.1
$region0: #{tpu_custom_call.1}
  #allocation0 [shape = 'u32[]', space=smem, size = 0x4, offset = 0x4, fixed_abs, tag = 'smem constant byte address 0x4 - core index']
  #allocation1 [shape = 'u32[72,128]{1,0:T(1,128)}', space=vmem, size = 0x9000, scoped, tag = 'internal scratch']
  %s0 = inlined_call_operand.vmem [shape: f32[2,48,16], index: 0, kind: input, shape index: {}]
  %s1 = inlined_call_operand.vmem [shape: f32[81], index: 1, kind: input, shape index: {}]
  %s2 = inlined_call_operand.vmem [shape: f32[3], index: 2, kind: input, shape index: {}]
  %s3 = inlined_call_operand.vmem [shape: f32[2,48,16], index: 3, kind: output, shape index: {}]
  %s4 = sld [smem:[#allocation0]]
  $region53: #{tpu_custom_call.1} parent=0
    _
  %s6 = ssub.s32 1, %s4
  %s7 = scalar_select 0, %s6, %s4
  $region1: #{tpu_custom_call.1} parent=0
    #allocation2 [shape = 'u8[512]{0}', space=smem, size = 0x200, scoped, tag = 'input window, operand 1, single buffered']
    #allocation3 [shape = 's32[2]{0}', space=sflag, size = 0x8, scoped, tag = 'scoped memory for tpu_custom_call.1']
    #allocation4 [shape = 'u8[512]{0}', space=smem, size = 0x200, scoped, tag = 'input window, operand 2, single buffered']
    #allocation5 [shape = 's32[1]{0}', space=sflag, size = 0x4, scoped, tag = 'scoped memory for tpu_custom_call.1']
    %8 = vsyncpa [#allocation3], 0
    %9 = vsyncpa [#allocation5], 0
    loop: start=0, step=1, limit=4
    $region2: #{tpu_custom_call.1} parent=1 // loop_pre_header
      _
    $region3: #{tpu_custom_call.1} parent=1 // loop_header
      %s11 = sphi 0, %s15
      %p12 = scmp.ge.s32.totalorder %s11, 4
      %s21 = sphi 0, %s23
      %s24 = sphi 0, %s21
      %s25 = sphi 0, %s24
      %s41 = sphi 0, %s25
      %s45 = sphi 0, %s45
      %s47 = sphi 0, %s45
      %s48 = sphi 0, %s47
      %s62 = sphi 0, %s48
      %s66 = sphi 0, %s66
      %s68 = sphi 0, %s66
      %s69 = sphi 0, %s68
      %s83 = sphi 0, %s69
      %s89 = sphi 0, %s91
      %s92 = sphi 0, %s89
      %s93 = sphi 0, %s92
      %s109 = sphi 0, %s93
    $region4: #{tpu_custom_call.1} parent=1 // loop_header_branch
      %14 = sbr.rel (%p12) target = $region8
    $region5: #{tpu_custom_call.1} parent=1 // loop_body
      %s16 = ssub.s32 %s11, 1
      %s17 = ssub.s32 %s11, 2
      %s18 = sadd.s32 %s11, 1
      %s19 = ssub.s32 %s11, %s18
      %p20 = scmp.eq.s32.totalorder %s19, 0
      %s22 = sadd.s32 %s21, 1
      %s23 = scalar_select %p20, %s21, %s22
      %p26 = pneg %p20
      %p27 = scmp.eq.s32.totalorder %s11, 1
      %p28 = por %p26, %p27
      %p29 = scmp.ne.s32.totalorder %s21, %s24
      %p30 = scmp.eq.s32.totalorder %s11, 0
      %p31 = por %p29, %p30
      %p32 = scmp.ne.s32.totalorder %s21, %s24
      %p33 = scmp.eq.s32.totalorder %s16, 1
      %p34 = por %p32, %p33
      %p35 = scmp.ne.s32.totalorder %s24, %s25
      %p36 = scmp.eq.s32.totalorder %s16, 0
      %p37 = por %p35, %p36
      %p38 = scmp.ne.s32.totalorder %s24, %s25
      %p39 = scmp.eq.s32.totalorder %s17, 1
      %p40 = por %p38, %p39
      %p42 = scmp.ne.s32.totalorder %s25, %s41
      %p43 = scmp.eq.s32.totalorder %s17, 0
      %p44 = por %p42, %p43
      %s46 = sadd.s32 %s45, 1
      %p49 = scmp.eq.s32.totalorder %s11, 1
      %p50 = scmp.ne.s32.totalorder %s45, %s47
      %p51 = scmp.eq.s32.totalorder %s11, 0
      %p52 = por %p50, %p51
      %p53 = scmp.ne.s32.totalorder %s45, %s47
      %p54 = scmp.eq.s32.totalorder %s16, 1
      %p55 = por %p53, %p54
      %p56 = scmp.ne.s32.totalorder %s47, %s48
      %p57 = scmp.eq.s32.totalorder %s16, 0
      %p58 = por %p56, %p57
      %p59 = scmp.ne.s32.totalorder %s47, %s48
      %p60 = scmp.eq.s32.totalorder %s17, 1
      %p61 = por %p59, %p60
      %p63 = scmp.ne.s32.totalorder %s48, %s62
      %p64 = scmp.eq.s32.totalorder %s17, 0
      %p65 = por %p63, %p64
      %s67 = sadd.s32 %s66, 1
      %p70 = scmp.eq.s32.totalorder %s11, 1
      %p71 = scmp.ne.s32.totalorder %s66, %s68
      %p72 = scmp.eq.s32.totalorder %s11, 0
      %p73 = por %p71, %p72
      %p74 = scmp.ne.s32.totalorder %s66, %s68
      %p75 = scmp.eq.s32.totalorder %s16, 1
      %p76 = por %p74, %p75
      %p77 = scmp.ne.s32.totalorder %s68, %s69
      %p78 = scmp.eq.s32.totalorder %s16, 0
      %p79 = por %p77, %p78
      %p80 = scmp.ne.s32.totalorder %s68, %s69
      %p81 = scmp.eq.s32.totalorder %s17, 1
      %p82 = por %p80, %p81
      %p84 = scmp.ne.s32.totalorder %s69, %s83
      %p85 = scmp.eq.s32.totalorder %s17, 0
      %p86 = por %p84, %p85
      %s87 = ssub.s32 %s11, %s18
      %p88 = scmp.eq.s32.totalorder %s87, 0
      %s90 = sadd.s32 %s89, 1
      %s91 = scalar_select %p88, %s89, %s90
      %p94 = pneg %p88
      %p95 = scmp.eq.s32.totalorder %s11, 1
      %p96 = por %p94, %p95
      %p97 = scmp.ne.s32.totalorder %s89, %s92
      %p98 = scmp.eq.s32.totalorder %s11, 0
      %p99 = por %p97, %p98
      %p100 = scmp.ne.s32.totalorder %s89, %s92
      %p101 = scmp.eq.s32.totalorder %s16, 1
      %p102 = por %p100, %p101
      %p103 = scmp.ne.s32.totalorder %s92, %s93
      %p104 = scmp.eq.s32.totalorder %s16, 0
      %p105 = por %p103, %p104
      %p106 = scmp.ne.s32.totalorder %s92, %s93
      %p107 = scmp.eq.s32.totalorder %s17, 1
      %p108 = por %p106, %p107
      %p110 = scmp.ne.s32.totalorder %s93, %s109
      %p111 = scmp.eq.s32.totalorder %s17, 0
      %p112 = por %p110, %p111
      %p113 = scmp.le.s32.totalorder 1, %s11
      %p114 = scmp.lt.s32.totalorder %s11, 3
      %p115 = pnand %p113, %p114
      %p116 = pneg %p115
      // Predicated region
      $region9: #{tpu_custom_call.1} parent=5 // pred_check
        _
      $region10: #{tpu_custom_call.1} parent=5 // pred_check_branch
        %118 = sbr.rel (%p115) target = $region12
      $region11: #{tpu_custom_call.1} parent=5 // pred_region
        %s119 = ssub.s32 %s11, 1
        // Predicated region
        $region13: #{tpu_custom_call.1} parent=11 // pred_check
          %p120 = pneg %p58
        $region14: #{tpu_custom_call.1} parent=11 // pred_check_branch
          %122 = sbr.rel (%p120) target = $region16
        $region15: #{tpu_custom_call.1} parent=11 // pred_region
          %124 = vsyncadd [#allocation3], 0
          %s126 = sshll.u32 %s1, 4
          %s127 = int_to_ptr.vmem [resolvable:$true] %s126
          %129 = dma.vmem_to_smem %s127, 16, [#allocation2], [#allocation3]
        $region16: #{tpu_custom_call.1} parent=11 // pred_fallthru
          _
        // Predicated region
        $region17: #{tpu_custom_call.1} parent=11 // pred_check
          %p130 = pneg %p79
        $region18: #{tpu_custom_call.1} parent=11 // pred_check_branch
          %132 = sbr.rel (%p130) target = $region20
        $region19: #{tpu_custom_call.1} parent=11 // pred_region
          %134 = vsyncadd [#allocation5], 0
          %s136 = sshll.u32 %s2, 4
          %s137 = int_to_ptr.vmem [resolvable:$true] %s136
          %139 = dma.vmem_to_smem %s137, 16, [#allocation4], [#allocation5]
        $region20: #{tpu_custom_call.1} parent=11 // pred_fallthru
          _
      $region12: #{tpu_custom_call.1} parent=5 // pred_fallthru
        _
      %p140 = scmp.lt.s32.totalorder %s11, 2
      // Predicated region
      $region21: #{tpu_custom_call.1} parent=5 // pred_check
        %p141 = pneg %p140
      $region22: #{tpu_custom_call.1} parent=5 // pred_check_branch
        %143 = sbr.rel (%p141) target = $region24
      $region23: #{tpu_custom_call.1} parent=5 // pred_region
        // Predicated region
        $region25: #{tpu_custom_call.1} parent=23 // pred_check
          %p144 = pneg %p31
        $region26: #{tpu_custom_call.1} parent=23 // pred_check_branch
          %146 = sbr.rel (%p144) target = $region28
        $region27: #{tpu_custom_call.1} parent=23 // pred_region
          %p147 = scmp.lt.s32.totalorder %s11, 1
          %s148 = scalar_select %p147, %s11, 1
          %s149 = smul.addr %s148, 6
          %s150 = smul.addr %s149, 8
          %s151 = scalar_lea.vmem %s0, %s150
        $region28: #{tpu_custom_call.1} parent=23 // pred_fallthru
          _
      $region24: #{tpu_custom_call.1} parent=5 // pred_fallthru
        _
      %p152 = scmp.le.s32.totalorder 1, %s11
      %p153 = scmp.lt.s32.totalorder %s11, 3
      %p154 = pnand %p152, %p153
      %p155 = pneg %p154
      // Predicated region
      $region29: #{tpu_custom_call.1} parent=5 // pred_check
        _
      $region30: #{tpu_custom_call.1} parent=5 // pred_check_branch
        %157 = sbr.rel (%p154) target = $region32
      $region31: #{tpu_custom_call.1} parent=5 // pred_region
        %s158 = ssub.s32 %s11, 1
        // Predicated region
        $region33: #{tpu_custom_call.1} parent=31 // pred_check
          %p159 = pneg %p58
        $region34: #{tpu_custom_call.1} parent=31 // pred_check_branch
          %161 = sbr.rel (%p159) target = $region36
        $region35: #{tpu_custom_call.1} parent=31 // pred_region
          %163 = dma.done [#allocation3], 16
        $region36: #{tpu_custom_call.1} parent=31 // pred_fallthru
          _
        // Predicated region
        $region37: #{tpu_custom_call.1} parent=31 // pred_check
          %p164 = pneg %p79
        $region38: #{tpu_custom_call.1} parent=31 // pred_check_branch
          %166 = sbr.rel (%p164) target = $region40
        $region39: #{tpu_custom_call.1} parent=31 // pred_region
          %168 = dma.done [#allocation5], 16
        $region40: #{tpu_custom_call.1} parent=31 // pred_fallthru
          _
        %169 = sfence
        %p170 = scmp.lt.s32.totalorder %s16, 1
        %s171 = scalar_select %p170, %s16, 1
        %s172 = smul.addr %s171, 6
        %s173 = smul.addr %s172, 8
        %s174 = scalar_lea.vmem %s0, %s173
        %p175 = pneg %p37
        %p176 = pneg %p34
        %p177 = pneg %p58
        %p178 = pneg %p55
        %p179 = pneg %p79
        %p180 = pneg %p76
        %p181 = pneg %p105
        %p182 = pneg %p102
        %p183 = scmp.lt.s32.totalorder %s16, 1
        %s184 = scalar_select %p183, %s16, 1
        %s185 = smul.addr %s184, 6
        %s186 = smul.addr %s185, 8
        %s187 = scalar_lea.vmem %s3, %s186
        %p188 = scmp.lt.s32.totalorder %s16, 1
        %s189 = scalar_select %p188, %s16, 1
        %s190 = smul.addr %s189, 6
        %s191 = smul.addr %s190, 8
        %s192 = scalar_lea.vmem %s0, %s191
        %p193 = scmp.lt.s32.totalorder %s16, 1
        %s194 = scalar_select %p193, %s16, 1
        %s195 = smul.addr %s194, 6
        %s196 = smul.addr %s195, 8
        %s197 = scalar_lea.vmem %s3, %s196
        %v198 = vlaneseq
        %v199 = vshrl.u32 %v198, 7
        %v200 = vadd.s32 %v199, 8
        %v201 = vlaneseq
        %v202 = vand.u32 %v201, 127
        %vm203 = vcmp.ge.s32.totalorder %v199, 1
        %vm204 = vcmp.ge.s32.totalorder %v200, 1
        %vm205 = vcmp.le.s32.totalorder %v199, 14
        %vm206 = vcmp.le.s32.totalorder %v200, 14
        %vm207 = vcmp.ge.s32.totalorder %v202, 1
        %vm208 = vcmp.le.s32.totalorder %v202, 14
        %v209 = vld [vmem:[%s192] sm:$0xff]
        %v210 = vld [vmem:[%s192 + $0x8] sm:$0xff]
        %v211 = vrot.slane %v209, 7
        %v212 = vrot.slane %v210, 7
        %vm213 = vcmp.lt.s32.totalorder %v199, 1
        %v214 = vsel %vm213, %v211, %v212
        %v215 = vsel %vm213, %v212, %v211
        %v216 = vsel %vm203, 1, 0
        %v217 = vsel %vm204, 1, 0
        %vm218 = vcmp.eq.s32.totalorder %v216, 1
        %vm219 = vcmp.eq.s32.totalorder %v217, 1
        %v220 = vsel %vm218, %v215, 0.0
        %v221 = vsel %vm219, %v214, 0.0
        %vm222 = vcmask 1047680
        %223 = vrot.lane.b32.xlu0 %v220, 16
        %v224 = vpop.permute.xlu0 %223
        %v225 = vsel %vm222, %v224, %v220
        %226 = vrot.lane.b32.xlu0 %v221, 16
        %v227 = vpop.permute.xlu0 %226
        %v228 = vsel %vm222, %v227, %v221
        %229 = vrot.lane.b32.xlu0 %v225, 16
        %v230 = vpop.permute.xlu0 %229
        %231 = vrot.lane.b32.xlu0 %v228, 16
        %v232 = vpop.permute.xlu0 %231
        %v233 = vsel %vm222, %v230, %v220
        %v234 = vsel %vm222, %v232, %v221
        %v235 = vsel %vm207, 1, 0
        %vm236 = vcmp.eq.s32.totalorder %v235, 1
        %239 = vrot.lane.b32.xlu0 %v233, 113
        %v240 = vpop.permute.xlu0 %239
        %241 = vrot.lane.b32.xlu0 %v234, 113
        %v242 = vpop.permute.xlu0 %241
        %v245 = vsel %vm236, %v240, 0.0
        %v246 = vsel %vm236, %v242, 0.0
        %s247 = sld [smem:[#allocation2]]
        %v248 = vstv %s247
        %v249 = vmul.f32 %v245, %v248
        %v250 = vmul.f32 %v246, %v248
        %v251 = vadd.f32 %v249, 0.0
        %v252 = vadd.f32 %v250, 0.0
        %s253 = sld [smem:[#allocation2 + $0x1b]]
        %v254 = vstv %s253
        %v255 = vmul.f32 %v245, %v254
        %v256 = vmul.f32 %v246, %v254
        %v257 = vadd.f32 %v255, 0.0
        %v258 = vadd.f32 %v256, 0.0
        %s259 = sld [smem:[#allocation2 + $0x36]]
        %v260 = vstv %s259
        %v261 = vmul.f32 %v245, %v260
        %v262 = vmul.f32 %v246, %v260
        %v263 = vadd.f32 %v261, 0.0
        %v264 = vadd.f32 %v262, 0.0
        %s265 = sld [smem:[#allocation2 + $0x1]]
        %v266 = vstv %s265
        %v267 = vmul.f32 %v220, %v266
        %v268 = vmul.f32 %v221, %v266
        %v269 = vadd.f32 %v251, %v267
        %v270 = vadd.f32 %v252, %v268
        %s271 = sld [smem:[#allocation2 + $0x1c]]
        %v272 = vstv %s271
        %v273 = vmul.f32 %v220, %v272
        %v274 = vmul.f32 %v221, %v272
        %v275 = vadd.f32 %v257, %v273
        %v276 = vadd.f32 %v258, %v274
        %s277 = sld [smem:[#allocation2 + $0x37]]
        %v278 = vstv %s277
        %v279 = vmul.f32 %v220, %v278
        %v280 = vmul.f32 %v221, %v278
        %v281 = vadd.f32 %v263, %v279
        %v282 = vadd.f32 %v264, %v280
        %v283 = vsel %vm208, 1, 0
        %vm284 = vcmp.eq.s32.totalorder %v283, 1
        %285 = vrot.lane.b32.xlu0 %v233, 127
        %v286 = vpop.permute.xlu0 %285
        %287 = vrot.lane.b32.xlu0 %v234, 127
        %v288 = vpop.permute.xlu0 %287
        %v291 = vsel %vm284, %v286, 0.0
        %v292 = vsel %vm284, %v288, 0.0
        %s293 = sld [smem:[#allocation2 + $0x2]]
        %v294 = vstv %s293
        %v295 = vmul.f32 %v291, %v294
        %v296 = vmul.f32 %v292, %v294
        %v297 = vadd.f32 %v269, %v295
        %v298 = vadd.f32 %v270, %v296
        %s299 = sld [smem:[#allocation2 + $0x1d]]
        %v300 = vstv %s299
        %v301 = vmul.f32 %v291, %v300
        %v302 = vmul.f32 %v292, %v300
        %v303 = vadd.f32 %v275, %v301
        %v304 = vadd.f32 %v276, %v302
        %s305 = sld [smem:[#allocation2 + $0x38]]
        %v306 = vstv %s305
        %v307 = vmul.f32 %v291, %v306
        %v308 = vmul.f32 %v292, %v306
        %v309 = vadd.f32 %v281, %v307
        %v310 = vadd.f32 %v282, %v308
        %311 = vrot.lane.b32.xlu0 %v209, 16
        %v312 = vpop.permute.xlu0 %311
        %v313 = vsel %vm222, %v312, %v209
        %314 = vrot.lane.b32.xlu0 %v210, 16
        %v315 = vpop.permute.xlu0 %314
        %v316 = vsel %vm222, %v315, %v210
        %317 = vrot.lane.b32.xlu0 %v313, 16
        %v318 = vpop.permute.xlu0 %317
        %319 = vrot.lane.b32.xlu0 %v316, 16
        %v320 = vpop.permute.xlu0 %319
        %v321 = vsel %vm222, %v318, %v209
        %v322 = vsel %vm222, %v320, %v210
        %325 = vrot.lane.b32.xlu0 %v321, 113
        %v326 = vpop.permute.xlu0 %325
        %327 = vrot.lane.b32.xlu0 %v322, 113
        %v328 = vpop.permute.xlu0 %327
        %v331 = vsel %vm236, %v326, 0.0
        %v332 = vsel %vm236, %v328, 0.0
        %s333 = sld [smem:[#allocation2 + $0x3]]
        %v334 = vstv %s333
        %v335 = vmul.f32 %v331, %v334
        %v336 = vmul.f32 %v332, %v334
        %v337 = vadd.f32 %v297, %v335
        %v338 = vadd.f32 %v298, %v336
        %s339 = sld [smem:[#allocation2 + $0x1e]]
        %v340 = vstv %s339
        %v341 = vmul.f32 %v331, %v340
        %v342 = vmul.f32 %v332, %v340
        %v343 = vadd.f32 %v303, %v341
        %v344 = vadd.f32 %v304, %v342
        %s345 = sld [smem:[#allocation2 + $0x39]]
        %v346 = vstv %s345
        %v347 = vmul.f32 %v331, %v346
        %v348 = vmul.f32 %v332, %v346
        %v349 = vadd.f32 %v309, %v347
        %v350 = vadd.f32 %v310, %v348
        %s351 = sld [smem:[#allocation2 + $0x4]]
        %v352 = vstv %s351
        %v353 = vmul.f32 %v209, %v352
        %v354 = vmul.f32 %v210, %v352
        %v355 = vadd.f32 %v337, %v353
        %v356 = vadd.f32 %v338, %v354
        %s357 = sld [smem:[#allocation2 + $0x1f]]
        %v358 = vstv %s357
        %v359 = vmul.f32 %v209, %v358
        %v360 = vmul.f32 %v210, %v358
        %v361 = vadd.f32 %v343, %v359
        %v362 = vadd.f32 %v344, %v360
        %s363 = sld [smem:[#allocation2 + $0x3a]]
        %v364 = vstv %s363
        %v365 = vmul.f32 %v209, %v364
        %v366 = vmul.f32 %v210, %v364
        %v367 = vadd.f32 %v349, %v365
        %v368 = vadd.f32 %v350, %v366
        %369 = vrot.lane.b32.xlu0 %v321, 127
        %v370 = vpop.permute.xlu0 %369
        %371 = vrot.lane.b32.xlu0 %v322, 127
        %v372 = vpop.permute.xlu0 %371
        %v375 = vsel %vm284, %v370, 0.0
        %v376 = vsel %vm284, %v372, 0.0
        %s377 = sld [smem:[#allocation2 + $0x5]]
        %v378 = vstv %s377
        %v379 = vmul.f32 %v375, %v378
        %v380 = vmul.f32 %v376, %v378
        %v381 = vadd.f32 %v355, %v379
        %v382 = vadd.f32 %v356, %v380
        %s383 = sld [smem:[#allocation2 + $0x20]]
        %v384 = vstv %s383
        %v385 = vmul.f32 %v375, %v384
        %v386 = vmul.f32 %v376, %v384
        %v387 = vadd.f32 %v361, %v385
        %v388 = vadd.f32 %v362, %v386
        %s389 = sld [smem:[#allocation2 + $0x3b]]
        %v390 = vstv %s389
        %v391 = vmul.f32 %v375, %v390
        %v392 = vmul.f32 %v376, %v390
        %v393 = vadd.f32 %v367, %v391
        %v394 = vadd.f32 %v368, %v392
        %v395 = vrot.slane %v209, 1
        %v396 = vrot.slane %v210, 1
        %vm397 = vcmp.lt.s32.totalorder %v199, 7
        %v398 = vsel %vm397, %v395, %v396
        %v399 = vsel %vm397, %v396, %v395
        %v400 = vsel %vm205, 1, 0
        %v401 = vsel %vm206, 1, 0
        %vm402 = vcmp.eq.s32.totalorder %v400, 1
        %vm403 = vcmp.eq.s32.totalorder %v401, 1
        %v404 = vsel %vm402, %v398, 0.0
        %v405 = vsel %vm403, %v399, 0.0
        %406 = vrot.lane.b32.xlu0 %v404, 16
        %v407 = vpop.permute.xlu0 %406
        %v408 = vsel %vm222, %v407, %v404
        %409 = vrot.lane.b32.xlu0 %v405, 16
        %v410 = vpop.permute.xlu0 %409
        %v411 = vsel %vm222, %v410, %v405
        %412 = vrot.lane.b32.xlu0 %v408, 16
        %v413 = vpop.permute.xlu0 %412
        %414 = vrot.lane.b32.xlu0 %v411, 16
        %v415 = vpop.permute.xlu0 %414
        %v416 = vsel %vm222, %v413, %v404
        %v417 = vsel %vm222, %v415, %v405
        %420 = vrot.lane.b32.xlu0 %v416, 113
        %v421 = vpop.permute.xlu0 %420
        %422 = vrot.lane.b32.xlu0 %v417, 113
        %v423 = vpop.permute.xlu0 %422
        %v426 = vsel %vm236, %v421, 0.0
        %v427 = vsel %vm236, %v423, 0.0
        %s428 = sld [smem:[#allocation2 + $0x6]]
        %v429 = vstv %s428
        %v430 = vmul.f32 %v426, %v429
        %v431 = vmul.f32 %v427, %v429
        %v432 = vadd.f32 %v381, %v430
        %v433 = vadd.f32 %v382, %v431
        %s434 = sld [smem:[#allocation2 + $0x21]]
        %v435 = vstv %s434
        %v436 = vmul.f32 %v426, %v435
        %v437 = vmul.f32 %v427, %v435
        %v438 = vadd.f32 %v387, %v436
        %v439 = vadd.f32 %v388, %v437
        %s440 = sld [smem:[#allocation2 + $0x3c]]
        %v441 = vstv %s440
        %v442 = vmul.f32 %v426, %v441
        %v443 = vmul.f32 %v427, %v441
        %v444 = vadd.f32 %v393, %v442
        %v445 = vadd.f32 %v394, %v443
        %s446 = sld [smem:[#allocation2 + $0x7]]
        %v447 = vstv %s446
        %v448 = vmul.f32 %v404, %v447
        %v449 = vmul.f32 %v405, %v447
        %v450 = vadd.f32 %v432, %v448
        %v451 = vadd.f32 %v433, %v449
        %s452 = sld [smem:[#allocation2 + $0x22]]
        %v453 = vstv %s452
        %v454 = vmul.f32 %v404, %v453
        %v455 = vmul.f32 %v405, %v453
        %v456 = vadd.f32 %v438, %v454
        %v457 = vadd.f32 %v439, %v455
        %s458 = sld [smem:[#allocation2 + $0x3d]]
        %v459 = vstv %s458
        %v460 = vmul.f32 %v404, %v459
        %v461 = vmul.f32 %v405, %v459
        %v462 = vadd.f32 %v444, %v460
        %v463 = vadd.f32 %v445, %v461
        %464 = vrot.lane.b32.xlu0 %v416, 127
        %v465 = vpop.permute.xlu0 %464
        %466 = vrot.lane.b32.xlu0 %v417, 127
        %v467 = vpop.permute.xlu0 %466
        %v470 = vsel %vm284, %v465, 0.0
        %v471 = vsel %vm284, %v467, 0.0
        %s472 = sld [smem:[#allocation2 + $0x8]]
        %v473 = vstv %s472
        %v474 = vmul.f32 %v470, %v473
        %v475 = vmul.f32 %v471, %v473
        %v476 = vadd.f32 %v450, %v474
        %v477 = vadd.f32 %v451, %v475
        %s478 = sld [smem:[#allocation2 + $0x23]]
        %v479 = vstv %s478
        %v480 = vmul.f32 %v470, %v479
        %v481 = vmul.f32 %v471, %v479
        %v482 = vadd.f32 %v456, %v480
        %v483 = vadd.f32 %v457, %v481
        %s484 = sld [smem:[#allocation2 + $0x3e]]
        %v485 = vstv %s484
        %v486 = vmul.f32 %v470, %v485
        %v487 = vmul.f32 %v471, %v485
        %v488 = vadd.f32 %v462, %v486
        %v489 = vadd.f32 %v463, %v487
        %v490 = vld [vmem:[%s192 + $0x10] sm:$0xff]
        %v491 = vld [vmem:[%s192 + $0x18] sm:$0xff]
        %v492 = vrot.slane %v490, 7
        %v493 = vrot.slane %v491, 7
        %v494 = vsel %vm213, %v492, %v493
        %v495 = vsel %vm213, %v493, %v492
        %v496 = vsel %vm218, %v495, 0.0
        %v497 = vsel %vm219, %v494, 0.0
        %498 = vrot.lane.b32.xlu0 %v496, 16
        %v499 = vpop.permute.xlu0 %498
        %v500 = vsel %vm222, %v499, %v496
        %501 = vrot.lane.b32.xlu0 %v497, 16
        %v502 = vpop.permute.xlu0 %501
        %v503 = vsel %vm222, %v502, %v497
        %504 = vrot.lane.b32.xlu0 %v500, 16
        %v505 = vpop.permute.xlu0 %504
        %506 = vrot.lane.b32.xlu0 %v503, 16
        %v507 = vpop.permute.xlu0 %506
        %v508 = vsel %vm222, %v505, %v496
        %v509 = vsel %vm222, %v507, %v497
        %512 = vrot.lane.b32.xlu0 %v508, 113
        %v513 = vpop.permute.xlu0 %512
        %514 = vrot.lane.b32.xlu0 %v509, 113
        %v515 = vpop.permute.xlu0 %514
        %v518 = vsel %vm236, %v513, 0.0
        %v519 = vsel %vm236, %v515, 0.0
        %s520 = sld [smem:[#allocation2 + $0x9]]
        %v521 = vstv %s520
        %v522 = vmul.f32 %v518, %v521
        %v523 = vmul.f32 %v519, %v521
        %v524 = vadd.f32 %v476, %v522
        %v525 = vadd.f32 %v477, %v523
        %s526 = sld [smem:[#allocation2 + $0x24]]
        %v527 = vstv %s526
        %v528 = vmul.f32 %v518, %v527
        %v529 = vmul.f32 %v519, %v527
        %v530 = vadd.f32 %v482, %v528
        %v531 = vadd.f32 %v483, %v529
        %s532 = sld [smem:[#allocation2 + $0x3f]]
        %v533 = vstv %s532
        %v534 = vmul.f32 %v518, %v533
        %v535 = vmul.f32 %v519, %v533
        %v536 = vadd.f32 %v488, %v534
        %v537 = vadd.f32 %v489, %v535
        %s538 = sld [smem:[#allocation2 + $0xa]]
        %v539 = vstv %s538
        %v540 = vmul.f32 %v496, %v539
        %v541 = vmul.f32 %v497, %v539
        %v542 = vadd.f32 %v524, %v540
        %v543 = vadd.f32 %v525, %v541
        %s544 = sld [smem:[#allocation2 + $0x25]]
        %v545 = vstv %s544
        %v546 = vmul.f32 %v496, %v545
        %v547 = vmul.f32 %v497, %v545
        %v548 = vadd.f32 %v530, %v546
        %v549 = vadd.f32 %v531, %v547
        %s550 = sld [smem:[#allocation2 + $0x40]]
        %v551 = vstv %s550
        %v552 = vmul.f32 %v496, %v551
        %v553 = vmul.f32 %v497, %v551
        %v554 = vadd.f32 %v536, %v552
        %v555 = vadd.f32 %v537, %v553
        %556 = vrot.lane.b32.xlu0 %v508, 127
        %v557 = vpop.permute.xlu0 %556
        %558 = vrot.lane.b32.xlu0 %v509, 127
        %v559 = vpop.permute.xlu0 %558
        %v562 = vsel %vm284, %v557, 0.0
        %v563 = vsel %vm284, %v559, 0.0
        %s564 = sld [smem:[#allocation2 + $0xb]]
        %v565 = vstv %s564
        %v566 = vmul.f32 %v562, %v565
        %v567 = vmul.f32 %v563, %v565
        %v568 = vadd.f32 %v542, %v566
        %v569 = vadd.f32 %v543, %v567
        %s570 = sld [smem:[#allocation2 + $0x26]]
        %v571 = vstv %s570
        %v572 = vmul.f32 %v562, %v571
        %v573 = vmul.f32 %v563, %v571
        %v574 = vadd.f32 %v548, %v572
        %v575 = vadd.f32 %v549, %v573
        %s576 = sld [smem:[#allocation2 + $0x41]]
        %v577 = vstv %s576
        %v578 = vmul.f32 %v562, %v577
        %v579 = vmul.f32 %v563, %v577
        %v580 = vadd.f32 %v554, %v578
        %v581 = vadd.f32 %v555, %v579
        %582 = vrot.lane.b32.xlu0 %v490, 16
        %v583 = vpop.permute.xlu0 %582
        %v584 = vsel %vm222, %v583, %v490
        %585 = vrot.lane.b32.xlu0 %v491, 16
        %v586 = vpop.permute.xlu0 %585
        %v587 = vsel %vm222, %v586, %v491
        %588 = vrot.lane.b32.xlu0 %v584, 16
        %v589 = vpop.permute.xlu0 %588
        %590 = vrot.lane.b32.xlu0 %v587, 16
        %v591 = vpop.permute.xlu0 %590
        %v592 = vsel %vm222, %v589, %v490
        %v593 = vsel %vm222, %v591, %v491
        %596 = vrot.lane.b32.xlu0 %v592, 113
        %v597 = vpop.permute.xlu0 %596
        %598 = vrot.lane.b32.xlu0 %v593, 113
        %v599 = vpop.permute.xlu0 %598
        %v602 = vsel %vm236, %v597, 0.0
        %v603 = vsel %vm236, %v599, 0.0
        %s604 = sld [smem:[#allocation2 + $0xc]]
        %v605 = vstv %s604
        %v606 = vmul.f32 %v602, %v605
        %v607 = vmul.f32 %v603, %v605
        %v608 = vadd.f32 %v568, %v606
        %v609 = vadd.f32 %v569, %v607
        %s610 = sld [smem:[#allocation2 + $0x27]]
        %v611 = vstv %s610
        %v612 = vmul.f32 %v602, %v611
        %v613 = vmul.f32 %v603, %v611
        %v614 = vadd.f32 %v574, %v612
        %v615 = vadd.f32 %v575, %v613
        %s616 = sld [smem:[#allocation2 + $0x42]]
        %v617 = vstv %s616
        %v618 = vmul.f32 %v602, %v617
        %v619 = vmul.f32 %v603, %v617
        %v620 = vadd.f32 %v580, %v618
        %v621 = vadd.f32 %v581, %v619
        %s622 = sld [smem:[#allocation2 + $0xd]]
        %v623 = vstv %s622
        %v624 = vmul.f32 %v490, %v623
        %v625 = vmul.f32 %v491, %v623
        %v626 = vadd.f32 %v608, %v624
        %v627 = vadd.f32 %v609, %v625
        %s628 = sld [smem:[#allocation2 + $0x28]]
        %v629 = vstv %s628
        %v630 = vmul.f32 %v490, %v629
        %v631 = vmul.f32 %v491, %v629
        %v632 = vadd.f32 %v614, %v630
        %v633 = vadd.f32 %v615, %v631
        %s634 = sld [smem:[#allocation2 + $0x43]]
        %v635 = vstv %s634
        %v636 = vmul.f32 %v490, %v635
        %v637 = vmul.f32 %v491, %v635
        %v638 = vadd.f32 %v620, %v636
        %v639 = vadd.f32 %v621, %v637
        %640 = vrot.lane.b32.xlu0 %v592, 127
        %v641 = vpop.permute.xlu0 %640
        %642 = vrot.lane.b32.xlu0 %v593, 127
        %v643 = vpop.permute.xlu0 %642
        %v646 = vsel %vm284, %v641, 0.0
        %v647 = vsel %vm284, %v643, 0.0
        %s648 = sld [smem:[#allocation2 + $0xe]]
        %v649 = vstv %s648
        %v650 = vmul.f32 %v646, %v649
        %v651 = vmul.f32 %v647, %v649
        %v652 = vadd.f32 %v626, %v650
        %v653 = vadd.f32 %v627, %v651
        %s654 = sld [smem:[#allocation2 + $0x29]]
        %v655 = vstv %s654
        %v656 = vmul.f32 %v646, %v655
        %v657 = vmul.f32 %v647, %v655
        %v658 = vadd.f32 %v632, %v656
        %v659 = vadd.f32 %v633, %v657
        %s660 = sld [smem:[#allocation2 + $0x44]]
        %v661 = vstv %s660
        %v662 = vmul.f32 %v646, %v661
        %v663 = vmul.f32 %v647, %v661
        %v664 = vadd.f32 %v638, %v662
        %v665 = vadd.f32 %v639, %v663
        %v666 = vrot.slane %v490, 1
        %v667 = vrot.slane %v491, 1
        %v668 = vsel %vm397, %v666, %v667
        %v669 = vsel %vm397, %v667, %v666
        %v670 = vsel %vm402, %v668, 0.0
        %v671 = vsel %vm403, %v669, 0.0
        %672 = vrot.lane.b32.xlu0 %v670, 16
        %v673 = vpop.permute.xlu0 %672
        %v674 = vsel %vm222, %v673, %v670
        %675 = vrot.lane.b32.xlu0 %v671, 16
        %v676 = vpop.permute.xlu0 %675
        %v677 = vsel %vm222, %v676, %v671
        %678 = vrot.lane.b32.xlu0 %v674, 16
        %v679 = vpop.permute.xlu0 %678
        %680 = vrot.lane.b32.xlu0 %v677, 16
        %v681 = vpop.permute.xlu0 %680
        %v682 = vsel %vm222, %v679, %v670
        %v683 = vsel %vm222, %v681, %v671
        %686 = vrot.lane.b32.xlu0 %v682, 113
        %v687 = vpop.permute.xlu0 %686
        %688 = vrot.lane.b32.xlu0 %v683, 113
        %v689 = vpop.permute.xlu0 %688
        %v692 = vsel %vm236, %v687, 0.0
        %v693 = vsel %vm236, %v689, 0.0
        %s694 = sld [smem:[#allocation2 + $0xf]]
        %v695 = vstv %s694
        %v696 = vmul.f32 %v692, %v695
        %v697 = vmul.f32 %v693, %v695
        %v698 = vadd.f32 %v652, %v696
        %v699 = vadd.f32 %v653, %v697
        %s700 = sld [smem:[#allocation2 + $0x2a]]
        %v701 = vstv %s700
        %v702 = vmul.f32 %v692, %v701
        %v703 = vmul.f32 %v693, %v701
        %v704 = vadd.f32 %v658, %v702
        %v705 = vadd.f32 %v659, %v703
        %s706 = sld [smem:[#allocation2 + $0x45]]
        %v707 = vstv %s706
        %v708 = vmul.f32 %v692, %v707
        %v709 = vmul.f32 %v693, %v707
        %v710 = vadd.f32 %v664, %v708
        %v711 = vadd.f32 %v665, %v709
        %s712 = sld [smem:[#allocation2 + $0x10]]
        %v713 = vstv %s712
        %v714 = vmul.f32 %v670, %v713
        %v715 = vmul.f32 %v671, %v713
        %v716 = vadd.f32 %v698, %v714
        %v717 = vadd.f32 %v699, %v715
        %s718 = sld [smem:[#allocation2 + $0x2b]]
        %v719 = vstv %s718
        %v720 = vmul.f32 %v670, %v719
        %v721 = vmul.f32 %v671, %v719
        %v722 = vadd.f32 %v704, %v720
        %v723 = vadd.f32 %v705, %v721
        %s724 = sld [smem:[#allocation2 + $0x46]]
        %v725 = vstv %s724
        %v726 = vmul.f32 %v670, %v725
        %v727 = vmul.f32 %v671, %v725
        %v728 = vadd.f32 %v710, %v726
        %v729 = vadd.f32 %v711, %v727
        %730 = vrot.lane.b32.xlu0 %v682, 127
        %v731 = vpop.permute.xlu0 %730
        %732 = vrot.lane.b32.xlu0 %v683, 127
        %v733 = vpop.permute.xlu0 %732
        %v736 = vsel %vm284, %v731, 0.0
        %v737 = vsel %vm284, %v733, 0.0
        %s738 = sld [smem:[#allocation2 + $0x11]]
        %v739 = vstv %s738
        %v740 = vmul.f32 %v736, %v739
        %v741 = vmul.f32 %v737, %v739
        %v742 = vadd.f32 %v716, %v740
        %v743 = vadd.f32 %v717, %v741
        %s744 = sld [smem:[#allocation2 + $0x2c]]
        %v745 = vstv %s744
        %v746 = vmul.f32 %v736, %v745
        %v747 = vmul.f32 %v737, %v745
        %v748 = vadd.f32 %v722, %v746
        %v749 = vadd.f32 %v723, %v747
        %s750 = sld [smem:[#allocation2 + $0x47]]
        %v751 = vstv %s750
        %v752 = vmul.f32 %v736, %v751
        %v753 = vmul.f32 %v737, %v751
        %v754 = vadd.f32 %v728, %v752
        %v755 = vadd.f32 %v729, %v753
        %v756 = vld [vmem:[%s192 + $0x20] sm:$0xff]
        %v757 = vld [vmem:[%s192 + $0x28] sm:$0xff]
        %v758 = vrot.slane %v756, 7
        %v759 = vrot.slane %v757, 7
        %v760 = vsel %vm213, %v758, %v759
        %v761 = vsel %vm213, %v759, %v758
        %v762 = vsel %vm218, %v761, 0.0
        %v763 = vsel %vm219, %v760, 0.0
        %764 = vrot.lane.b32.xlu0 %v762, 16
        %v765 = vpop.permute.xlu0 %764
        %v766 = vsel %vm222, %v765, %v762
        %767 = vrot.lane.b32.xlu0 %v763, 16
        %v768 = vpop.permute.xlu0 %767
        %v769 = vsel %vm222, %v768, %v763
        %770 = vrot.lane.b32.xlu0 %v766, 16
        %v771 = vpop.permute.xlu0 %770
        %772 = vrot.lane.b32.xlu0 %v769, 16
        %v773 = vpop.permute.xlu0 %772
        %v774 = vsel %vm222, %v771, %v762
        %v775 = vsel %vm222, %v773, %v763
        %778 = vrot.lane.b32.xlu0 %v774, 113
        %v779 = vpop.permute.xlu0 %778
        %780 = vrot.lane.b32.xlu0 %v775, 113
        %v781 = vpop.permute.xlu0 %780
        %v784 = vsel %vm236, %v779, 0.0
        %v785 = vsel %vm236, %v781, 0.0
        %s786 = sld [smem:[#allocation2 + $0x12]]
        %v787 = vstv %s786
        %v788 = vmul.f32 %v784, %v787
        %v789 = vmul.f32 %v785, %v787
        %v790 = vadd.f32 %v742, %v788
        %v791 = vadd.f32 %v743, %v789
        %s792 = sld [smem:[#allocation2 + $0x2d]]
        %v793 = vstv %s792
        %v794 = vmul.f32 %v784, %v793
        %v795 = vmul.f32 %v785, %v793
        %v796 = vadd.f32 %v748, %v794
        %v797 = vadd.f32 %v749, %v795
        %s798 = sld [smem:[#allocation2 + $0x48]]
        %v799 = vstv %s798
        %v800 = vmul.f32 %v784, %v799
        %v801 = vmul.f32 %v785, %v799
        %v802 = vadd.f32 %v754, %v800
        %v803 = vadd.f32 %v755, %v801
        %s804 = sld [smem:[#allocation2 + $0x13]]
        %v805 = vstv %s804
        %v806 = vmul.f32 %v762, %v805
        %v807 = vmul.f32 %v763, %v805
        %v808 = vadd.f32 %v790, %v806
        %v809 = vadd.f32 %v791, %v807
        %s810 = sld [smem:[#allocation2 + $0x2e]]
        %v811 = vstv %s810
        %v812 = vmul.f32 %v762, %v811
        %v813 = vmul.f32 %v763, %v811
        %v814 = vadd.f32 %v796, %v812
        %v815 = vadd.f32 %v797, %v813
        %s816 = sld [smem:[#allocation2 + $0x49]]
        %v817 = vstv %s816
        %v818 = vmul.f32 %v762, %v817
        %v819 = vmul.f32 %v763, %v817
        %v820 = vadd.f32 %v802, %v818
        %v821 = vadd.f32 %v803, %v819
        %822 = vrot.lane.b32.xlu0 %v774, 127
        %v823 = vpop.permute.xlu0 %822
        %824 = vrot.lane.b32.xlu0 %v775, 127
        %v825 = vpop.permute.xlu0 %824
        %v828 = vsel %vm284, %v823, 0.0
        %v829 = vsel %vm284, %v825, 0.0
        %s830 = sld [smem:[#allocation2 + $0x14]]
        %v831 = vstv %s830
        %v832 = vmul.f32 %v828, %v831
        %v833 = vmul.f32 %v829, %v831
        %v834 = vadd.f32 %v808, %v832
        %v835 = vadd.f32 %v809, %v833
        %s836 = sld [smem:[#allocation2 + $0x2f]]
        %v837 = vstv %s836
        %v838 = vmul.f32 %v828, %v837
        %v839 = vmul.f32 %v829, %v837
        %v840 = vadd.f32 %v814, %v838
        %v841 = vadd.f32 %v815, %v839
        %s842 = sld [smem:[#allocation2 + $0x4a]]
        %v843 = vstv %s842
        %v844 = vmul.f32 %v828, %v843
        %v845 = vmul.f32 %v829, %v843
        %v846 = vadd.f32 %v820, %v844
        %v847 = vadd.f32 %v821, %v845
        %848 = vrot.lane.b32.xlu0 %v756, 16
        %v849 = vpop.permute.xlu0 %848
        %v850 = vsel %vm222, %v849, %v756
        %851 = vrot.lane.b32.xlu0 %v757, 16
        %v852 = vpop.permute.xlu0 %851
        %v853 = vsel %vm222, %v852, %v757
        %854 = vrot.lane.b32.xlu0 %v850, 16
        %v855 = vpop.permute.xlu0 %854
        %856 = vrot.lane.b32.xlu0 %v853, 16
        %v857 = vpop.permute.xlu0 %856
        %v858 = vsel %vm222, %v855, %v756
        %v859 = vsel %vm222, %v857, %v757
        %862 = vrot.lane.b32.xlu0 %v858, 113
        %v863 = vpop.permute.xlu0 %862
        %864 = vrot.lane.b32.xlu0 %v859, 113
        %v865 = vpop.permute.xlu0 %864
        %v868 = vsel %vm236, %v863, 0.0
        %v869 = vsel %vm236, %v865, 0.0
        %s870 = sld [smem:[#allocation2 + $0x15]]
        %v871 = vstv %s870
        %v872 = vmul.f32 %v868, %v871
        %v873 = vmul.f32 %v869, %v871
        %v874 = vadd.f32 %v834, %v872
        %v875 = vadd.f32 %v835, %v873
        %s876 = sld [smem:[#allocation2 + $0x30]]
        %v877 = vstv %s876
        %v878 = vmul.f32 %v868, %v877
        %v879 = vmul.f32 %v869, %v877
        %v880 = vadd.f32 %v840, %v878
        %v881 = vadd.f32 %v841, %v879
        %s882 = sld [smem:[#allocation2 + $0x4b]]
        %v883 = vstv %s882
        %v884 = vmul.f32 %v868, %v883
        %v885 = vmul.f32 %v869, %v883
        %v886 = vadd.f32 %v846, %v884
        %v887 = vadd.f32 %v847, %v885
        %s888 = sld [smem:[#allocation2 + $0x16]]
        %v889 = vstv %s888
        %v890 = vmul.f32 %v756, %v889
        %v891 = vmul.f32 %v757, %v889
        %v892 = vadd.f32 %v874, %v890
        %v893 = vadd.f32 %v875, %v891
        %s894 = sld [smem:[#allocation2 + $0x31]]
        %v895 = vstv %s894
        %v896 = vmul.f32 %v756, %v895
        %v897 = vmul.f32 %v757, %v895
        %v898 = vadd.f32 %v880, %v896
        %v899 = vadd.f32 %v881, %v897
        %s900 = sld [smem:[#allocation2 + $0x4c]]
        %v901 = vstv %s900
        %v902 = vmul.f32 %v756, %v901
        %v903 = vmul.f32 %v757, %v901
        %v904 = vadd.f32 %v886, %v902
        %v905 = vadd.f32 %v887, %v903
        %906 = vrot.lane.b32.xlu0 %v858, 127
        %v907 = vpop.permute.xlu0 %906
        %908 = vrot.lane.b32.xlu0 %v859, 127
        %v909 = vpop.permute.xlu0 %908
        %v912 = vsel %vm284, %v907, 0.0
        %v913 = vsel %vm284, %v909, 0.0
        %s914 = sld [smem:[#allocation2 + $0x17]]
        %v915 = vstv %s914
        %v916 = vmul.f32 %v912, %v915
        %v917 = vmul.f32 %v913, %v915
        %v918 = vadd.f32 %v892, %v916
        %v919 = vadd.f32 %v893, %v917
        %s920 = sld [smem:[#allocation2 + $0x32]]
        %v921 = vstv %s920
        %v922 = vmul.f32 %v912, %v921
        %v923 = vmul.f32 %v913, %v921
        %v924 = vadd.f32 %v898, %v922
        %v925 = vadd.f32 %v899, %v923
        %s926 = sld [smem:[#allocation2 + $0x4d]]
        %v927 = vstv %s926
        %v928 = vmul.f32 %v912, %v927
        %v929 = vmul.f32 %v913, %v927
        %v930 = vadd.f32 %v904, %v928
        %v931 = vadd.f32 %v905, %v929
        %v932 = vrot.slane %v756, 1
        %v933 = vrot.slane %v757, 1
        %v934 = vsel %vm397, %v932, %v933
        %v935 = vsel %vm397, %v933, %v932
        %v936 = vsel %vm402, %v934, 0.0
        %v937 = vsel %vm403, %v935, 0.0
        %938 = vrot.lane.b32.xlu0 %v936, 16
        %v939 = vpop.permute.xlu0 %938
        %v940 = vsel %vm222, %v939, %v936
        %941 = vrot.lane.b32.xlu0 %v937, 16
        %v942 = vpop.permute.xlu0 %941
        %v943 = vsel %vm222, %v942, %v937
        %944 = vrot.lane.b32.xlu0 %v940, 16
        %v945 = vpop.permute.xlu0 %944
        %946 = vrot.lane.b32.xlu0 %v943, 16
        %v947 = vpop.permute.xlu0 %946
        %v948 = vsel %vm222, %v945, %v936
        %v949 = vsel %vm222, %v947, %v937
        %952 = vrot.lane.b32.xlu0 %v948, 113
        %v953 = vpop.permute.xlu0 %952
        %954 = vrot.lane.b32.xlu0 %v949, 113
        %v955 = vpop.permute.xlu0 %954
        %v958 = vsel %vm236, %v953, 0.0
        %v959 = vsel %vm236, %v955, 0.0
        %s960 = sld [smem:[#allocation2 + $0x18]]
        %v961 = vstv %s960
        %v962 = vmul.f32 %v958, %v961
        %v963 = vmul.f32 %v959, %v961
        %v964 = vadd.f32 %v918, %v962
        %v965 = vadd.f32 %v919, %v963
        %s966 = sld [smem:[#allocation2 + $0x33]]
        %v967 = vstv %s966
        %v968 = vmul.f32 %v958, %v967
        %v969 = vmul.f32 %v959, %v967
        %v970 = vadd.f32 %v924, %v968
        %v971 = vadd.f32 %v925, %v969
        %s972 = sld [smem:[#allocation2 + $0x4e]]
        %v973 = vstv %s972
        %v974 = vmul.f32 %v958, %v973
        %v975 = vmul.f32 %v959, %v973
        %v976 = vadd.f32 %v930, %v974
        %v977 = vadd.f32 %v931, %v975
        %s978 = sld [smem:[#allocation2 + $0x19]]
        %v979 = vstv %s978
        %v980 = vmul.f32 %v936, %v979
        %v981 = vmul.f32 %v937, %v979
        %v982 = vadd.f32 %v964, %v980
        %v983 = vadd.f32 %v965, %v981
        %s984 = sld [smem:[#allocation2 + $0x34]]
        %v985 = vstv %s984
        %v986 = vmul.f32 %v936, %v985
        %v987 = vmul.f32 %v937, %v985
        %v988 = vadd.f32 %v970, %v986
        %v989 = vadd.f32 %v971, %v987
        %s990 = sld [smem:[#allocation2 + $0x4f]]
        %v991 = vstv %s990
        %v992 = vmul.f32 %v936, %v991
        %v993 = vmul.f32 %v937, %v991
        %v994 = vadd.f32 %v976, %v992
        %v995 = vadd.f32 %v977, %v993
        %996 = vrot.lane.b32.xlu0 %v948, 127
        %v997 = vpop.permute.xlu0 %996
        %998 = vrot.lane.b32.xlu0 %v949, 127
        %v999 = vpop.permute.xlu0 %998
        %v1002 = vsel %vm284, %v997, 0.0
        %v1003 = vsel %vm284, %v999, 0.0
        %s1004 = sld [smem:[#allocation2 + $0x1a]]
        %v1005 = vstv %s1004
        %v1006 = vmul.f32 %v1002, %v1005
        %v1007 = vmul.f32 %v1003, %v1005
        %v1008 = vadd.f32 %v982, %v1006
        %v1009 = vadd.f32 %v983, %v1007
        %s1010 = sld [smem:[#allocation2 + $0x35]]
        %v1011 = vstv %s1010
        %v1012 = vmul.f32 %v1002, %v1011
        %v1013 = vmul.f32 %v1003, %v1011
        %v1014 = vadd.f32 %v988, %v1012
        %v1015 = vadd.f32 %v989, %v1013
        %s1016 = sld [smem:[#allocation2 + $0x50]]
        %v1017 = vstv %s1016
        %v1018 = vmul.f32 %v1002, %v1017
        %v1019 = vmul.f32 %v1003, %v1017
        %v1020 = vadd.f32 %v994, %v1018
        %v1021 = vadd.f32 %v995, %v1019
        %s1022 = sld [smem:[#allocation4]]
        %v1023 = vstv %s1022
        %v1024 = vadd.f32 %v1008, %v1023
        %v1025 = vadd.f32 %v1009, %v1023
        %v1026 = vmax.f32 %v1024, 0.0
        %v1027 = vmax.f32 %v1025, 0.0
        %vm1028 = vcmask 130048
        %1029 = vst.msk [vmem:[%s197] sm:$0xff] %vm1028, %v1026
        %1030 = vst.msk [vmem:[%s197 + $0x8] sm:$0xff] %vm1028, %v1027
        %s1031 = sld [smem:[#allocation4 + $0x1]]
        %v1032 = vstv %s1031
        %v1033 = vadd.f32 %v1014, %v1032
        %v1034 = vadd.f32 %v1015, %v1032
        %v1035 = vmax.f32 %v1033, 0.0
        %v1036 = vmax.f32 %v1034, 0.0
        %1037 = vst.msk [vmem:[%s197 + $0x10] sm:$0xff] %vm1028, %v1035
        %1038 = vst.msk [vmem:[%s197 + $0x18] sm:$0xff] %vm1028, %v1036
        %s1039 = sld [smem:[#allocation4 + $0x2]]
        %v1040 = vstv %s1039
        %v1041 = vadd.f32 %v1020, %v1040
        %v1042 = vadd.f32 %v1021, %v1040
        %v1043 = vmax.f32 %v1041, 0.0
        %v1044 = vmax.f32 %v1042, 0.0
        %1045 = vst.msk [vmem:[%s197 + $0x20] sm:$0xff] %vm1028, %v1043
        %1046 = vst.msk [vmem:[%s197 + $0x28] sm:$0xff] %vm1028, %v1044
        %p1047 = scmp.lt.s32.totalorder %s16, 1
        %s1048 = scalar_select %p1047, %s16, 1
        %s1049 = smul.addr %s1048, 6
        %s1050 = smul.addr %s1049, 8
        %s1051 = scalar_lea.vmem %s3, %s1050
        // Predicated region
        $region41: #{tpu_custom_call.1} parent=31 // pred_check
          %p1052 = pneg %p102
        $region42: #{tpu_custom_call.1} parent=31 // pred_check_branch
          %1054 = sbr.rel (%p1052) target = $region44
        $region43: #{tpu_custom_call.1} parent=31 // pred_region
          _
        $region44: #{tpu_custom_call.1} parent=31 // pred_fallthru
          _
      $region32: #{tpu_custom_call.1} parent=5 // pred_fallthru
        _
      %p1055 = scmp.le.s32.totalorder 2, %s11
      // Predicated region
      $region45: #{tpu_custom_call.1} parent=5 // pred_check
        %p1056 = pneg %p1055
      $region46: #{tpu_custom_call.1} parent=5 // pred_check_branch
        %1058 = sbr.rel (%p1056) target = $region48
      $region47: #{tpu_custom_call.1} parent=5 // pred_region
        %s1059 = ssub.s32 %s11, 2
        // Predicated region
        $region49: #{tpu_custom_call.1} parent=47 // pred_check
          %p1060 = pneg %p108
        $region50: #{tpu_custom_call.1} parent=47 // pred_check_branch
          %1062 = sbr.rel (%p1060) target = $region52
        $region51: #{tpu_custom_call.1} parent=47 // pred_region
          %p1063 = scmp.lt.s32.totalorder %s17, 1
          %s1064 = scalar_select %p1063, %s17, 1
          %s1065 = smul.addr %s1064, 6
          %s1066 = smul.addr %s1065, 8
          %s1067 = scalar_lea.vmem %s3, %s1066
        $region52: #{tpu_custom_call.1} parent=47 // pred_fallthru
          _
      $region48: #{tpu_custom_call.1} parent=5 // pred_fallthru
        _
    $region6: #{tpu_custom_call.1} parent=1 // loop_footer
      %s15 = sadd.s32 1, %s11
    $region7: #{tpu_custom_call.1} parent=1 // loop_footer_branch
      %10 = sbr.rel target = $region3
    $region8: #{tpu_custom_call.1} parent=1 // loop_exit
      _
    %1068 = vsyncpa [#allocation3], 1
    %s1069 = scalar_lea.sflag [#allocation3], 1
    %1070 = vsyncpa %s1069, 1
    %1071 = vsyncpa [#allocation5], 1

</llo_original>
